<compile_context>
chip_gen: v7x
topology: tpu7x:2x2x1
jax: 0.10.0
libtpu: 0.0.40
codegen_flags: <defaults>
</compile_context>

<pallas_src>
import jax
import jax.numpy as jnp
from jax import lax
from jax.experimental import pallas as pl
from jax.experimental.pallas import tpu as pltpu

# Shapes consistent with the module spec (block_size=128, n_embd=384), head
# size chosen lane-aligned.  All lane dims are multiples of 128.
BATCH = 2
SEQ = 128            # == block_size
N_EMBD = 384         # == n_embd in the spec (3 * 128, lane-aligned)
HEAD_SIZE = 128      # head_size argument of Head()
SCALE = HEAD_SIZE ** (-0.5)
NEG_INF = -1e30      # large finite negative (bf16/f32 safe, underflows to 0 in softmax)


def head_kernel(x_ref, wqkv_ref, out_ref):
    # x_ref: (B, T, C) f32 | wqkv_ref: (C, 3*hs) bf16 | out_ref: (B, T, hs) f32
    B, T, C = x_ref.shape
    hs = HEAD_SIZE

    # Whole batch as one (B*T, C) operand: M=256 fills the 256x256 MXU on
    # v6e/v7x for the dominant fused QKV matmul.  Reshape only collapses the
    # leading dims (last dim unchanged) -> layout-preserving.
    x2d = x_ref[...].reshape(B * T, C).astype(jnp.bfloat16)          # (B*T, C)

    qkv = jnp.dot(x2d, wqkv_ref[...],
                  preferred_element_type=jnp.float32)                # (B*T, 3*hs) f32
    qkv = qkv.reshape(B, T, 3 * hs)

    # 128-aligned lane slices; SCALE is already folded into the q weights.
    q = qkv[..., 0:hs].astype(jnp.bfloat16)
    k = qkv[..., hs:2 * hs].astype(jnp.bfloat16)
    v = qkv[..., 2 * hs:3 * hs].astype(jnp.bfloat16)

    # Scores: batched contraction over the last dims (no explicit k.T).
    s = jnp.einsum("bqd,bkd->bqk", q, k,
                   preferred_element_type=jnp.float32)               # (B, T, T) f32

    # Causal mask: single select, no extra additive bias tile.
    row = lax.broadcasted_iota(jnp.int32, (T, T), 0)
    col = lax.broadcasted_iota(jnp.int32, (T, T), 1)
    s = jnp.where((col <= row)[None, :, :], s, NEG_INF)

    # Numerically stable softmax with normalization deferred past the PV
    # matmul (divide the small (B,T,hs) output, not the (B,T,T) tile).
    m = jnp.max(s, axis=-1, keepdims=True)
    p = jnp.exp(s - m)                                               # (B, T, T) f32
    l = jnp.sum(p, axis=-1, keepdims=True)                           # (B, T, 1) f32

    # TODO(synk): attention dropout (nn.Dropout(0.2)) is identity in eval mode;
    # training-mode parity would need pltpu.prng_seed/prng_random_bits masking.

    o = jnp.einsum("bqk,bkd->bqd", p.astype(jnp.bfloat16), v,
                   preferred_element_type=jnp.float32)               # (B, T, hs) f32
    out_ref[...] = (o * pl.reciprocal(l, approx=True)).astype(out_ref.dtype)


@jax.jit
def head_forward(x, w_qkv):
    B, T, C = x.shape
    hs = HEAD_SIZE
    cost = pl.CostEstimate(
        flops=2 * B * T * C * (3 * hs)        # fused qkv projection
        + 2 * B * T * T * hs                  # q @ k^T
        + 2 * B * T * T * hs,                 # p @ v
        transcendentals=B * T * T,            # exp in softmax
        bytes_accessed=x.size * x.dtype.itemsize
        + w_qkv.size * w_qkv.dtype.itemsize
        + B * T * hs * 4,
    )
    return pl.pallas_call(
        head_kernel,
        out_shape=jax.ShapeDtypeStruct((B, T, hs), jnp.float32),
        grid_spec=pltpu.PrefetchScalarGridSpec(
            num_scalar_prefetch=0,
            # Single grid step: whole batch resident in VMEM (<2 MiB working
            # set), no per-step pipeline overhead, one DMA per operand.
            grid=(1,),
            in_specs=[
                pl.BlockSpec((B, T, C), lambda i: (0, 0, 0)),
                pl.BlockSpec((C, 3 * hs), lambda i: (0, 0)),
            ],
            out_specs=pl.BlockSpec((B, T, hs), lambda i: (0, 0, 0)),
        ),
        compiler_params=pltpu.CompilerParams(
            dimension_semantics=("arbitrary",),
        ),
        cost_estimate=cost,
    )(x, w_qkv)


def make_params(key):
    """torch.nn.Linear(n_embd, head_size, bias=False)-style weights fused as a
    single (C, 3*hs) [q | k | v] matrix in bfloat16, with the attention scale
    hs^-0.5 folded into the q columns (in f32, before the bf16 cast)."""
    kq, kk, kv = jax.random.split(key, 3)
    bound = 1.0 / (N_EMBD ** 0.5)

    def lin(k):
        # stored (in, out) so the kernel computes x @ W (= x @ torch_weight.T)
        return jax.random.uniform(k, (N_EMBD, HEAD_SIZE), jnp.float32, -bound, bound)

    wq = lin(kq) * SCALE          # fold scale once at parameter build time
    wk, wv = lin(kk), lin(kv)
    return jnp.concatenate([wq, wk, wv], axis=1).astype(jnp.bfloat16)


def reference_forward(x, w_qkv):
    """Pure-JAX reference of Head.forward (eval mode), same bf16/f32 mix.
    Scale is already folded into the q columns of w_qkv."""
    T = x.shape[1]
    xb = x.astype(jnp.bfloat16)
    qkv = jnp.einsum("btc,cd->btd", xb, w_qkv,
                     preferred_element_type=jnp.float32)
    q = qkv[..., 0:HEAD_SIZE].astype(jnp.bfloat16)
    k = qkv[..., HEAD_SIZE:2 * HEAD_SIZE].astype(jnp.bfloat16)
    v = qkv[..., 2 * HEAD_SIZE:3 * HEAD_SIZE].astype(jnp.bfloat16)
    s = jnp.einsum("bqd,bkd->bqk", q, k, preferred_element_type=jnp.float32)
    mask = jnp.tril(jnp.ones((T, T), bool))
    s = jnp.where(mask, s, NEG_INF)
    p = jax.nn.softmax(s, axis=-1)
    return jnp.einsum("bqk,bkd->bqd", p.astype(jnp.bfloat16), v,
                      preferred_element_type=jnp.float32)


if __name__ == "__main__":
    key = jax.random.PRNGKey(0)
    kx, kw = jax.random.split(key)
    x = jax.random.normal(kx, (BATCH, SEQ, N_EMBD), jnp.float32)
    w_qkv = make_params(kw)

    out = jax.block_until_ready(head_forward(x, w_qkv))
    ref = reference_forward(x, w_qkv)

    assert out.shape == (BATCH, SEQ, HEAD_SIZE)
    assert bool(jnp.all(jnp.isfinite(out)))
    err = float(jnp.max(jnp.abs(out - ref)))
    # loose tolerance: bf16 operands, deferred normalization, approx reciprocal
    assert err < 2e-2, err

    print("KERNEL_OK")
</pallas_src>

<mosaic_0001>
module attributes {stable_mosaic.version = 11 : i64} {
  func.func @head_kernel(%arg0: i32, %arg1: memref<2x128x384xf32, #tpu.memory_space<vmem>>, %arg2: memref<384x384xbf16, #tpu.memory_space<vmem>>, %arg3: memref<2x128x128xf32, #tpu.memory_space<vmem>>) attributes {dimension_semantics = [#tpu.dimension_semantics<arbitrary>], iteration_bounds = array<i64: 1>, scalar_prefetch = 0 : i64, scratch_operands = 0 : i64, tpu.core_type = #tpu.core_type<tc>, window_params = [{pipeline_mode = #tpu.pipeline_mode<synchronous>, transform_indices = @transform_0, window_bounds = array<i64: 2, 128, 384>}, {pipeline_mode = #tpu.pipeline_mode<synchronous>, transform_indices = @transform_1, window_bounds = array<i64: 384, 384>}, {pipeline_mode = #tpu.pipeline_mode<synchronous>, transform_indices = @transform_2, window_bounds = array<i64: 2, 128, 128>}]} {
    %c0 = arith.constant 0 : index
    %c0_0 = arith.constant 0 : index
    %c0_1 = arith.constant 0 : index
    %0 = vector.load %arg1[%c0, %c0_0, %c0_1] : memref<2x128x384xf32, #tpu.memory_space<vmem>>, vector<2x128x384xf32>
    %1 = vector.shape_cast %0 : vector<2x128x384xf32> to vector<256x384xf32>
    %2 = arith.truncf %1 : vector<256x384xf32> to vector<256x384xbf16>
    %c0_2 = arith.constant 0 : index
    %c0_3 = arith.constant 0 : index
    %3 = vector.load %arg2[%c0_2, %c0_3] : memref<384x384xbf16, #tpu.memory_space<vmem>>, vector<384x384xbf16>
    %cst = arith.constant dense<0.000000e+00> : vector<256x384xf32>
    %4 = tpu.matmul %2, %3, %cst {dimension_numbers = #tpu.dot_dimension_numbers<[1], [0], [0], [1], [0, 0, 1, 1], [], []>} : vector<256x384xbf16>, vector<384x384xbf16>, vector<256x384xf32> -> vector<256x384xf32>
    %5 = vector.shape_cast %4 : vector<256x384xf32> to vector<2x128x384xf32>
    %6 = vector.extract_strided_slice %5 {offsets = [0, 0, 0], sizes = [2, 128, 128], strides = [1, 1, 1]} : vector<2x128x384xf32> to vector<2x128x128xf32>
    %7 = arith.truncf %6 : vector<2x128x128xf32> to vector<2x128x128xbf16>
    %8 = vector.extract_strided_slice %5 {offsets = [0, 0, 128], sizes = [2, 128, 128], strides = [1, 1, 1]} : vector<2x128x384xf32> to vector<2x128x128xf32>
    %9 = arith.truncf %8 : vector<2x128x128xf32> to vector<2x128x128xbf16>
    %10 = vector.extract_strided_slice %5 {offsets = [0, 0, 256], sizes = [2, 128, 128], strides = [1, 1, 1]} : vector<2x128x384xf32> to vector<2x128x128xf32>
    %11 = arith.truncf %10 : vector<2x128x128xf32> to vector<2x128x128xbf16>
    "tpu.trace_start"() <{level = 10 : i32, message = "bqd,bkd->bqk"}> : () -> ()
    %cst_4 = arith.constant dense<0.000000e+00> : vector<2x128x128xf32>
    %12 = tpu.matmul %7, %9, %cst_4 {dimension_numbers = #tpu.dot_dimension_numbers<[2], [2], [1], [1], [0, 0, 0, 1, 1, 1], [0], [0]>} : vector<2x128x128xbf16>, vector<2x128x128xbf16>, vector<2x128x128xf32> -> vector<2x128x128xf32>
    "tpu.trace_stop"() : () -> ()
    %13 = tpu.iota {dimensions = array<i32: 0>} : vector<128x128xi32>
    %14 = tpu.iota {dimensions = array<i32: 1>} : vector<128x128xi32>
    %15 = arith.cmpi sle, %14, %13 : vector<128x128xi32>
    %16 = vector.shape_cast %15 : vector<128x128xi1> to vector<1x128x128xi1>
    %cst_5 = arith.constant -1.000000e+30 : f32
    %17 = vector.shape_cast %16 : vector<1x128x128xi1> to vector<1x128x128xi1>
    %18 = vector.broadcast %17 : vector<1x128x128xi1> to vector<2x128x128xi1>
    %19 = vector.broadcast %cst_5 : f32 to vector<2x128x128xf32>
    %20 = arith.select %18, %12, %19 : vector<2x128x128xi1>, vector<2x128x128xf32>
    %cst_6 = arith.constant dense<0xFF800000> : vector<2x128xf32>
    %21 = vector.multi_reduction <maximumf>, %20, %cst_6 [2] : vector<2x128x128xf32> to vector<2x128xf32>
    %22 = vector.shape_cast %21 : vector<2x128xf32> to vector<2x128x1xf32>
    %23 = vector.broadcast %22 : vector<2x128x1xf32> to vector<2x128x128xf32>
    %24 = arith.subf %20, %23 : vector<2x128x128xf32>
    %25 = math.exp %24 : vector<2x128x128xf32>
    %cst_7 = arith.constant dense<0.000000e+00> : vector<2x128xf32>
    %26 = vector.multi_reduction <add>, %25, %cst_7 [2] : vector<2x128x128xf32> to vector<2x128xf32>
    %27 = vector.shape_cast %26 : vector<2x128xf32> to vector<2x128x1xf32>
    %28 = arith.truncf %25 : vector<2x128x128xf32> to vector<2x128x128xbf16>
    "tpu.trace_start"() <{level = 10 : i32, message = "bqk,bkd->bqd"}> : () -> ()
    %cst_8 = arith.constant dense<0.000000e+00> : vector<2x128x128xf32>
    %29 = tpu.matmul %28, %11, %cst_8 {dimension_numbers = #tpu.dot_dimension_numbers<[2], [1], [1], [2], [0, 0, 0, 1, 1, 2], [0], [0]>} : vector<2x128x128xbf16>, vector<2x128x128xbf16>, vector<2x128x128xf32> -> vector<2x128x128xf32>
    "tpu.trace_stop"() : () -> ()
    %30 = tpu.reciprocal %27 {approx = true} : vector<2x128x1xf32> -> vector<2x128x1xf32>
    %31 = vector.broadcast %30 : vector<2x128x1xf32> to vector<2x128x128xf32>
    %32 = arith.mulf %29, %31 : vector<2x128x128xf32>
    %c0_9 = arith.constant 0 : index
    %c0_10 = arith.constant 0 : index
    %c0_11 = arith.constant 0 : index
    %33 = vector.load %arg3[%c0_9, %c0_10, %c0_11] : memref<2x128x128xf32, #tpu.memory_space<vmem>>, vector<2x128x128xf32>
    tpu.vector_store %arg3[%c0_9, %c0_10, %c0_11], %32 {strides = array<i32>} : memref<2x128x128xf32, #tpu.memory_space<vmem>>, vector<2x128x128xf32>,
    return
  }
  func.func @transform_0(%arg0: i32) -> (i32, i32, i32) {
    %c0_i32 = arith.constant 0 : i32
    %c0_i32_0 = arith.constant 0 : i32
    %c0_i32_1 = arith.constant 0 : i32
    %c0_i32_2 = arith.constant 0 : i32
    return %c0_i32, %c0_i32_0, %c0_i32_1 : i32, i32, i32
  }
  func.func @transform_1(%arg0: i32) -> (i32, i32) {
    %c0_i32 = arith.constant 0 : i32
    %c0_i32_0 = arith.constant 0 : i32
    %c0_i32_1 = arith.constant 0 : i32
    return %c0_i32, %c0_i32_0 : i32, i32
  }
  func.func @transform_2(%arg0: i32) -> (i32, i32, i32) {
    %c0_i32 = arith.constant 0 : i32
    %c0_i32_0 = arith.constant 0 : i32
    %c0_i32_1 = arith.constant 0 : i32
    %c0_i32_2 = arith.constant 0 : i32
    return %c0_i32, %c0_i32_0, %c0_i32_1 : i32, i32, i32
  }
}

</mosaic_0001>

<llo_original>
// kernel: head_forward.1
$region0: #{head_forward.1}
  #allocation0 [shape = 'u32[]', space=smem, size = 0x4, offset = 0x4, fixed_abs, tag = 'smem constant byte address 0x4 - core index']
  #allocation1 [shape = 'u32[144,128]{1,0:T(1,128)}', space=vmem, size = 0x12000, scoped, tag = 'internal scratch']
  %s0 = inlined_call_operand.hbm [shape: f32[2,128,384], index: 0, kind: input, shape index: {}]
  %s1 = inlined_call_operand.hbm [shape: bf16[384,384], index: 1, kind: input, shape index: {}]
  %s2 = inlined_call_operand.hbm [shape: f32[2,128,128], index: 2, kind: output, shape index: {}]
  %s3 = sld [smem:[#allocation0]]
  $region26: #{head_forward.1} parent=0
    _
  %s5 = ssub.s32 1, %s3
  %s6 = scalar_select 0, %s5, %s3
  $region1: #{head_forward.1} parent=0
    #allocation2 [shape = 'u8[393216]{0}', space=vmem, size = 0x60000, scoped, tag = 'input window, operand 0, single buffered']
    #allocation3 [shape = 's32[1]{0}', space=sflag, size = 0x4, scoped, tag = 'scoped memory for head_forward.1']
    #allocation4 [shape = 's32[1]{0}', space=sflag, size = 0x4, scoped, tag = 'scoped memory for head_forward.1']
    #allocation5 [shape = 'u8[294912]{0}', space=vmem, size = 0x48000, scoped, tag = 'input window, operand 1, single buffered']
    #allocation6 [shape = 's32[1]{0}', space=sflag, size = 0x4, scoped, tag = 'scoped memory for head_forward.1']
    #allocation7 [shape = 'u8[131072]{0}', space=vmem, size = 0x20000, scoped, tag = 'output window, operand 0, single buffered']
    %7 = vsyncpa [#allocation3], 0
    %8 = vsyncpa [#allocation6], 0
    %9 = vsyncpa [#allocation4], 0
    // Predicated region
    $region2: #{head_forward.1} parent=1 // pred_check
      _
    $region3: #{head_forward.1} parent=1 // pred_check_branch
      %11 = sbr.rel (0) target = $region5
    $region4: #{head_forward.1} parent=1 // pred_region
      %s13 = ssub.s32 12288, 12288
      %14 = vsyncadd [#allocation3], %s13
      %s15 = sshll.u32 [#allocation2], 4
      %s16 = int_to_ptr.vmem [resolvable:$true] %s15
      %21 = dma.hbm_to_vmem [thread:$0]  %s0, 12288, %s16, [#allocation3], 384, 384, 24
    $region5: #{head_forward.1} parent=1 // pred_fallthru
      _
    // Predicated region
    $region6: #{head_forward.1} parent=1 // pred_check
      _
    $region7: #{head_forward.1} parent=1 // pred_check_branch
      %23 = sbr.rel (0) target = $region9
    $region8: #{head_forward.1} parent=1 // pred_region
      %s25 = ssub.s32 9216, 9216
      %26 = vsyncadd [#allocation6], %s25
      %s27 = sshll.u32 [#allocation5], 4
      %s28 = int_to_ptr.vmem [resolvable:$true] %s27
      %33 = dma.hbm_to_vmem [thread:$0]  %s1, 9216, %s28, [#allocation6], 192, 192, 12
    $region9: #{head_forward.1} parent=1 // pred_fallthru
      _
    // Predicated region
    $region10: #{head_forward.1} parent=1 // pred_check
      _
    $region11: #{head_forward.1} parent=1 // pred_check_branch
      %35 = sbr.rel (0) target = $region13
    $region12: #{head_forward.1} parent=1 // pred_region
      %36 = dma.done [#allocation3], 12288
    $region13: #{head_forward.1} parent=1 // pred_fallthru
      _
    // Predicated region
    $region14: #{head_forward.1} parent=1 // pred_check
      _
    $region15: #{head_forward.1} parent=1 // pred_check_branch
      %38 = sbr.rel (0) target = $region17
    $region16: #{head_forward.1} parent=1 // pred_region
      %39 = dma.done [#allocation6], 9216
    $region17: #{head_forward.1} parent=1 // pred_fallthru
      _
    %v41 = vld [vmem:[#allocation2] sm:$0xff]
    %v42 = vld [vmem:[#allocation2 + $0x8] sm:$0xff]
    %v43 = vld [vmem:[#allocation2 + $0x10] sm:$0xff]
    %v44 = vld [vmem:[#allocation2 + $0x18] sm:$0xff]
    %v45 = vld [vmem:[#allocation2 + $0x20] sm:$0xff]
    %v46 = vld [vmem:[#allocation2 + $0x28] sm:$0xff]
    %v47 = vld [vmem:[#allocation2 + $0x30] sm:$0xff]
    %v48 = vld [vmem:[#allocation2 + $0x38] sm:$0xff]
    %v49 = vld [vmem:[#allocation2 + $0x40] sm:$0xff]
    %v50 = vld [vmem:[#allocation2 + $0x48] sm:$0xff]
    %v51 = vld [vmem:[#allocation2 + $0x50] sm:$0xff]
    %v52 = vld [vmem:[#allocation2 + $0x58] sm:$0xff]
    %v53 = vld [vmem:[#allocation2 + $0x60] sm:$0xff]
    %v54 = vld [vmem:[#allocation2 + $0x68] sm:$0xff]
    %v55 = vld [vmem:[#allocation2 + $0x70] sm:$0xff]
    %v56 = vld [vmem:[#allocation2 + $0x78] sm:$0xff]
    %v57 = vld [vmem:[#allocation2 + $0x80] sm:$0xff]
    %v58 = vld [vmem:[#allocation2 + $0x88] sm:$0xff]
    %v59 = vld [vmem:[#allocation2 + $0x90] sm:$0xff]
    %v60 = vld [vmem:[#allocation2 + $0x98] sm:$0xff]
    %v61 = vld [vmem:[#allocation2 + $0xa0] sm:$0xff]
    %v62 = vld [vmem:[#allocation2 + $0xa8] sm:$0xff]
    %v63 = vld [vmem:[#allocation2 + $0xb0] sm:$0xff]
    %v64 = vld [vmem:[#allocation2 + $0xb8] sm:$0xff]
    %v65 = vld [vmem:[#allocation2 + $0xc0] sm:$0xff]
    %v66 = vld [vmem:[#allocation2 + $0xc8] sm:$0xff]
    %v67 = vld [vmem:[#allocation2 + $0xd0] sm:$0xff]
    %v68 = vld [vmem:[#allocation2 + $0xd8] sm:$0xff]
    %v69 = vld [vmem:[#allocation2 + $0xe0] sm:$0xff]
    %v70 = vld [vmem:[#allocation2 + $0xe8] sm:$0xff]
    %v71 = vld [vmem:[#allocation2 + $0xf0] sm:$0xff]
    %v72 = vld [vmem:[#allocation2 + $0xf8] sm:$0xff]
    %v73 = vld [vmem:[#allocation2 + $0x100] sm:$0xff]
    %v74 = vld [vmem:[#allocation2 + $0x108] sm:$0xff]
    %v75 = vld [vmem:[#allocation2 + $0x110] sm:$0xff]
    %v76 = vld [vmem:[#allocation2 + $0x118] sm:$0xff]
    %v77 = vld [vmem:[#allocation2 + $0x120] sm:$0xff]
    %v78 = vld [vmem:[#allocation2 + $0x128] sm:$0xff]
    %v79 = vld [vmem:[#allocation2 + $0x130] sm:$0xff]
    %v80 = vld [vmem:[#allocation2 + $0x138] sm:$0xff]
    %v81 = vld [vmem:[#allocation2 + $0x140] sm:$0xff]
    %v82 = vld [vmem:[#allocation2 + $0x148] sm:$0xff]
    %v83 = vld [vmem:[#allocation2 + $0x150] sm:$0xff]
    %v84 = vld [vmem:[#allocation2 + $0x158] sm:$0xff]
    %v85 = vld [vmem:[#allocation2 + $0x160] sm:$0xff]
    %v86 = vld [vmem:[#allocation2 + $0x168] sm:$0xff]
    %v87 = vld [vmem:[#allocation2 + $0x170] sm:$0xff]
    %v88 = vld [vmem:[#allocation2 + $0x178] sm:$0xff]
    %v89 = vld [vmem:[#allocation2 + $0x180] sm:$0xff]
    %v90 = vld [vmem:[#allocation2 + $0x188] sm:$0xff]
    %v91 = vld [vmem:[#allocation2 + $0x190] sm:$0xff]
    %v92 = vld [vmem:[#allocation2 + $0x198] sm:$0xff]
    %v93 = vld [vmem:[#allocation2 + $0x1a0] sm:$0xff]
    %v94 = vld [vmem:[#allocation2 + $0x1a8] sm:$0xff]
    %v95 = vld [vmem:[#allocation2 + $0x1b0] sm:$0xff]
    %v96 = vld [vmem:[#allocation2 + $0x1b8] sm:$0xff]
    %v97 = vld [vmem:[#allocation2 + $0x1c0] sm:$0xff]
    %v98 = vld [vmem:[#allocation2 + $0x1c8] sm:$0xff]
    %v99 = vld [vmem:[#allocation2 + $0x1d0] sm:$0xff]
    %v100 = vld [vmem:[#allocation2 + $0x1d8] sm:$0xff]
    %v101 = vld [vmem:[#allocation2 + $0x1e0] sm:$0xff]
    %v102 = vld [vmem:[#allocation2 + $0x1e8] sm:$0xff]
    %v103 = vld [vmem:[#allocation2 + $0x1f0] sm:$0xff]
    %v104 = vld [vmem:[#allocation2 + $0x1f8] sm:$0xff]
    %v105 = vld [vmem:[#allocation2 + $0x200] sm:$0xff]
    %v106 = vld [vmem:[#allocation2 + $0x208] sm:$0xff]
    %v107 = vld [vmem:[#allocation2 + $0x210] sm:$0xff]
    %v108 = vld [vmem:[#allocation2 + $0x218] sm:$0xff]
    %v109 = vld [vmem:[#allocation2 + $0x220] sm:$0xff]
    %v110 = vld [vmem:[#allocation2 + $0x228] sm:$0xff]
    %v111 = vld [vmem:[#allocation2 + $0x230] sm:$0xff]
    %v112 = vld [vmem:[#allocation2 + $0x238] sm:$0xff]
    %v113 = vld [vmem:[#allocation2 + $0x240] sm:$0xff]
    %v114 = vld [vmem:[#allocation2 + $0x248] sm:$0xff]
    %v115 = vld [vmem:[#allocation2 + $0x250] sm:$0xff]
    %v116 = vld [vmem:[#allocation2 + $0x258] sm:$0xff]
    %v117 = vld [vmem:[#allocation2 + $0x260] sm:$0xff]
    %v118 = vld [vmem:[#allocation2 + $0x268] sm:$0xff]
    %v119 = vld [vmem:[#allocation2 + $0x270] sm:$0xff]
    %v120 = vld [vmem:[#allocation2 + $0x278] sm:$0xff]
    %v121 = vld [vmem:[#allocation2 + $0x280] sm:$0xff]
    %v122 = vld [vmem:[#allocation2 + $0x288] sm:$0xff]
    %v123 = vld [vmem:[#allocation2 + $0x290] sm:$0xff]
    %v124 = vld [vmem:[#allocation2 + $0x298] sm:$0xff]
    %v125 = vld [vmem:[#allocation2 + $0x2a0] sm:$0xff]
    %v126 = vld [vmem:[#allocation2 + $0x2a8] sm:$0xff]
    %v127 = vld [vmem:[#allocation2 + $0x2b0] sm:$0xff]
    %v128 = vld [vmem:[#allocation2 + $0x2b8] sm:$0xff]
    %v129 = vld [vmem:[#allocation2 + $0x2c0] sm:$0xff]
    %v130 = vld [vmem:[#allocation2 + $0x2c8] sm:$0xff]
    %v131 = vld [vmem:[#allocation2 + $0x2d0] sm:$0xff]
    %v132 = vld [vmem:[#allocation2 + $0x2d8] sm:$0xff]
    %v133 = vld [vmem:[#allocation2 + $0x2e0] sm:$0xff]
    %v134 = vld [vmem:[#allocation2 + $0x2e8] sm:$0xff]
    %v135 = vld [vmem:[#allocation2 + $0x2f0] sm:$0xff]
    %v136 = vld [vmem:[#allocation2 + $0x2f8] sm:$0xff]
    %v137 = vpack.c.bf16 %v44, %v41
    %v138 = vpack.c.bf16 %v45, %v42
    %v139 = vpack.c.bf16 %v46, %v43
    %v140 = vpack.c.bf16 %v50, %v47
    %v141 = vpack.c.bf16 %v51, %v48
    %v142 = vpack.c.bf16 %v52, %v49
    %v143 = vpack.c.bf16 %v56, %v53
    %v144 = vpack.c.bf16 %v57, %v54
    %v145 = vpack.c.bf16 %v58, %v55
    %v146 = vpack.c.bf16 %v62, %v59
    %v147 = vpack.c.bf16 %v63, %v60
    %v148 = vpack.c.bf16 %v64, %v61
    %v149 = vpack.c.bf16 %v68, %v65
    %v150 = vpack.c.bf16 %v69, %v66
    %v151 = vpack.c.bf16 %v70, %v67
    %v152 = vpack.c.bf16 %v74, %v71
    %v153 = vpack.c.bf16 %v75, %v72
    %v154 = vpack.c.bf16 %v76, %v73
    %v155 = vpack.c.bf16 %v80, %v77
    %v156 = vpack.c.bf16 %v81, %v78
    %v157 = vpack.c.bf16 %v82, %v79
    %v158 = vpack.c.bf16 %v86, %v83
    %v159 = vpack.c.bf16 %v87, %v84
    %v160 = vpack.c.bf16 %v88, %v85
    %v161 = vpack.c.bf16 %v92, %v89
    %v162 = vpack.c.bf16 %v93, %v90
    %v163 = vpack.c.bf16 %v94, %v91
    %v164 = vpack.c.bf16 %v98, %v95
    %v165 = vpack.c.bf16 %v99, %v96
    %v166 = vpack.c.bf16 %v100, %v97
    %v167 = vpack.c.bf16 %v104, %v101
    %v168 = vpack.c.bf16 %v105, %v102
    %v169 = vpack.c.bf16 %v106, %v103
    %v170 = vpack.c.bf16 %v110, %v107
    %v171 = vpack.c.bf16 %v111, %v108
    %v172 = vpack.c.bf16 %v112, %v109
    %v173 = vpack.c.bf16 %v116, %v113
    %v174 = vpack.c.bf16 %v117, %v114
    %v175 = vpack.c.bf16 %v118, %v115
    %v176 = vpack.c.bf16 %v122, %v119
    %v177 = vpack.c.bf16 %v123, %v120
    %v178 = vpack.c.bf16 %v124, %v121
    %v179 = vpack.c.bf16 %v128, %v125
    %v180 = vpack.c.bf16 %v129, %v126
    %v181 = vpack.c.bf16 %v130, %v127
    %v182 = vpack.c.bf16 %v134, %v131
    %v183 = vpack.c.bf16 %v135, %v132
    %v184 = vpack.c.bf16 %v136, %v133
    %v185 = vld [vmem:[#allocation5] sm:$0xff]
    %v186 = vld [vmem:[#allocation5 + $0x8] sm:$0xf]
    %v187 = vld [vmem:[#allocation5 + $0xc] sm:$0xff]
    %v188 = vld [vmem:[#allocation5 + $0x14] sm:$0xf]
    %v189 = vld [vmem:[#allocation5 + $0x18] sm:$0xff]
    %v190 = vld [vmem:[#allocation5 + $0x20] sm:$0xf]
    %v191 = vld [vmem:[#allocation5 + $0x24] sm:$0xff]
    %v192 = vld [vmem:[#allocation5 + $0x2c] sm:$0xf]
    %v193 = vld [vmem:[#allocation5 + $0x30] sm:$0xff]
    %v194 = vld [vmem:[#allocation5 + $0x38] sm:$0xf]
    %v195 = vld [vmem:[#allocation5 + $0x3c] sm:$0xff]
    %v196 = vld [vmem:[#allocation5 + $0x44] sm:$0xf]
    %v197 = vld [vmem:[#allocation5 + $0x48] sm:$0xff]
    %v198 = vld [vmem:[#allocation5 + $0x50] sm:$0xf]
    %v199 = vld [vmem:[#allocation5 + $0x54] sm:$0xff]
    %v200 = vld [vmem:[#allocation5 + $0x5c] sm:$0xf]
    %v201 = vld [vmem:[#allocation5 + $0x60] sm:$0xff]
    %v202 = vld [vmem:[#allocation5 + $0x68] sm:$0xf]
    %v203 = vld [vmem:[#allocation5 + $0x6c] sm:$0xff]
    %v204 = vld [vmem:[#allocation5 + $0x74] sm:$0xf]
    %v205 = vld [vmem:[#allocation5 + $0x78] sm:$0xff]
    %v206 = vld [vmem:[#allocation5 + $0x80] sm:$0xf]
    %v207 = vld [vmem:[#allocation5 + $0x84] sm:$0xff]
    %v208 = vld [vmem:[#allocation5 + $0x8c] sm:$0xf]
    %v209 = vld [vmem:[#allocation5 + $0x90] sm:$0xff]
    %v210 = vld [vmem:[#allocation5 + $0x98] sm:$0xf]
    %v211 = vld [vmem:[#allocation5 + $0x9c] sm:$0xff]
    %v212 = vld [vmem:[#allocation5 + $0xa4] sm:$0xf]
    %v213 = vld [vmem:[#allocation5 + $0xa8] sm:$0xff]
    %v214 = vld [vmem:[#allocation5 + $0xb0] sm:$0xf]
    %v215 = vld [vmem:[#allocation5 + $0xb4] sm:$0xff]
    %v216 = vld [vmem:[#allocation5 + $0xbc] sm:$0xf]
    %v217 = vld [vmem:[#allocation5 + $0xc0] sm:$0xff]
    %v218 = vld [vmem:[#allocation5 + $0xc8] sm:$0xf]
    %v219 = vld [vmem:[#allocation5 + $0xcc] sm:$0xff]
    %v220 = vld [vmem:[#allocation5 + $0xd4] sm:$0xf]
    %v221 = vld [vmem:[#allocation5 + $0xd8] sm:$0xff]
    %v222 = vld [vmem:[#allocation5 + $0xe0] sm:$0xf]
    %v223 = vld [vmem:[#allocation5 + $0xe4] sm:$0xff]
    %v224 = vld [vmem:[#allocation5 + $0xec] sm:$0xf]
    %v225 = vld [vmem:[#allocation5 + $0xf0] sm:$0xff]
    %v226 = vld [vmem:[#allocation5 + $0xf8] sm:$0xf]
    %v227 = vld [vmem:[#allocation5 + $0xfc] sm:$0xff]
    %v228 = vld [vmem:[#allocation5 + $0x104] sm:$0xf]
    %v229 = vld [vmem:[#allocation5 + $0x108] sm:$0xff]
    %v230 = vld [vmem:[#allocation5 + $0x110] sm:$0xf]
    %v231 = vld [vmem:[#allocation5 + $0x114] sm:$0xff]
    %v232 = vld [vmem:[#allocation5 + $0x11c] sm:$0xf]
    %v233 = vld [vmem:[#allocation5 + $0x120] sm:$0xff]
    %v234 = vld [vmem:[#allocation5 + $0x128] sm:$0xf]
    %v235 = vld [vmem:[#allocation5 + $0x12c] sm:$0xff]
    %v236 = vld [vmem:[#allocation5 + $0x134] sm:$0xf]
    %v237 = vld [vmem:[#allocation5 + $0x138] sm:$0xff]
    %v238 = vld [vmem:[#allocation5 + $0x140] sm:$0xf]
    %v239 = vld [vmem:[#allocation5 + $0x144] sm:$0xff]
    %v240 = vld [vmem:[#allocation5 + $0x14c] sm:$0xf]
    %v241 = vld [vmem:[#allocation5 + $0x150] sm:$0xff]
    %v242 = vld [vmem:[#allocation5 + $0x158] sm:$0xf]
    %v243 = vld [vmem:[#allocation5 + $0x15c] sm:$0xff]
    %v244 = vld [vmem:[#allocation5 + $0x164] sm:$0xf]
    %v245 = vld [vmem:[#allocation5 + $0x168] sm:$0xff]
    %v246 = vld [vmem:[#allocation5 + $0x170] sm:$0xf]
    %v247 = vld [vmem:[#allocation5 + $0x174] sm:$0xff]
    %v248 = vld [vmem:[#allocation5 + $0x17c] sm:$0xf]
    %v249 = vld [vmem:[#allocation5 + $0x180] sm:$0xff]
    %v250 = vld [vmem:[#allocation5 + $0x188] sm:$0xf]
    %v251 = vld [vmem:[#allocation5 + $0x18c] sm:$0xff]
    %v252 = vld [vmem:[#allocation5 + $0x194] sm:$0xf]
    %v253 = vld [vmem:[#allocation5 + $0x198] sm:$0xff]
    %v254 = vld [vmem:[#allocation5 + $0x1a0] sm:$0xf]
    %v255 = vld [vmem:[#allocation5 + $0x1a4] sm:$0xff]
    %v256 = vld [vmem:[#allocation5 + $0x1ac] sm:$0xf]
    %v257 = vld [vmem:[#allocation5 + $0x1b0] sm:$0xff]
    %v258 = vld [vmem:[#allocation5 + $0x1b8] sm:$0xf]
    %v259 = vld [vmem:[#allocation5 + $0x1bc] sm:$0xff]
    %v260 = vld [vmem:[#allocation5 + $0x1c4] sm:$0xf]
    %v261 = vld [vmem:[#allocation5 + $0x1c8] sm:$0xff]
    %v262 = vld [vmem:[#allocation5 + $0x1d0] sm:$0xf]
    %v263 = vld [vmem:[#allocation5 + $0x1d4] sm:$0xff]
    %v264 = vld [vmem:[#allocation5 + $0x1dc] sm:$0xf]
    %v265 = vld [vmem:[#allocation5 + $0x1e0] sm:$0xff]
    %v266 = vld [vmem:[#allocation5 + $0x1e8] sm:$0xf]
    %v267 = vld [vmem:[#allocation5 + $0x1ec] sm:$0xff]
    %v268 = vld [vmem:[#allocation5 + $0x1f4] sm:$0xf]
    %v269 = vld [vmem:[#allocation5 + $0x1f8] sm:$0xff]
    %v270 = vld [vmem:[#allocation5 + $0x200] sm:$0xf]
    %v271 = vld [vmem:[#allocation5 + $0x204] sm:$0xff]
    %v272 = vld [vmem:[#allocation5 + $0x20c] sm:$0xf]
    %v273 = vld [vmem:[#allocation5 + $0x210] sm:$0xff]
    %v274 = vld [vmem:[#allocation5 + $0x218] sm:$0xf]
    %v275 = vld [vmem:[#allocation5 + $0x21c] sm:$0xff]
    %v276 = vld [vmem:[#allocation5 + $0x224] sm:$0xf]
    %v277 = vld [vmem:[#allocation5 + $0x228] sm:$0xff]
    %v278 = vld [vmem:[#allocation5 + $0x230] sm:$0xf]
    %v279 = vld [vmem:[#allocation5 + $0x234] sm:$0xff]
    %v280 = vld [vmem:[#allocation5 + $0x23c] sm:$0xf]
    %v377 = vunpack.c.l.b16 %v185
    %v378 = vunpack.c.h.b16 %v185
    %v379 = vunpack.c.l.b16 %v186
    %v380 = vunpack.c.l.b16 %v187
    %v381 = vunpack.c.h.b16 %v187
    %v382 = vunpack.c.l.b16 %v188
    %v383 = vunpack.c.l.b16 %v189
    %v384 = vunpack.c.h.b16 %v189
    %v385 = vunpack.c.l.b16 %v190
    %v386 = vunpack.c.l.b16 %v191
    %v387 = vunpack.c.h.b16 %v191
    %v388 = vunpack.c.l.b16 %v192
    %v389 = vunpack.c.l.b16 %v193
    %v390 = vunpack.c.h.b16 %v193
    %v391 = vunpack.c.l.b16 %v194
    %v392 = vunpack.c.l.b16 %v195
    %v393 = vunpack.c.h.b16 %v195
    %v394 = vunpack.c.l.b16 %v196
    %v395 = vunpack.c.l.b16 %v197
    %v396 = vunpack.c.h.b16 %v197
    %v397 = vunpack.c.l.b16 %v198
    %v398 = vunpack.c.l.b16 %v199
    %v399 = vunpack.c.h.b16 %v199
    %v400 = vunpack.c.l.b16 %v200
    %v401 = vunpack.c.l.b16 %v201
    %v402 = vunpack.c.h.b16 %v201
    %v403 = vunpack.c.l.b16 %v202
    %v404 = vunpack.c.l.b16 %v203
    %v405 = vunpack.c.h.b16 %v203
    %v406 = vunpack.c.l.b16 %v204
    %v407 = vunpack.c.l.b16 %v205
    %v408 = vunpack.c.h.b16 %v205
    %v409 = vunpack.c.l.b16 %v206
    %v410 = vunpack.c.l.b16 %v207
    %v411 = vunpack.c.h.b16 %v207
    %v412 = vunpack.c.l.b16 %v208
    %v413 = vunpack.c.l.b16 %v209
    %v414 = vunpack.c.h.b16 %v209
    %v415 = vunpack.c.l.b16 %v210
    %v416 = vunpack.c.l.b16 %v211
    %v417 = vunpack.c.h.b16 %v211
    %v418 = vunpack.c.l.b16 %v212
    %v419 = vunpack.c.l.b16 %v213
    %v420 = vunpack.c.h.b16 %v213
    %v421 = vunpack.c.l.b16 %v214
    %v422 = vunpack.c.l.b16 %v215
    %v423 = vunpack.c.h.b16 %v215
    %v424 = vunpack.c.l.b16 %v216
    %v425 = vunpack.c.l.b16 %v217
    %v426 = vunpack.c.h.b16 %v217
    %v427 = vunpack.c.l.b16 %v218
    %v428 = vunpack.c.l.b16 %v219
    %v429 = vunpack.c.h.b16 %v219
    %v430 = vunpack.c.l.b16 %v220
    %v431 = vunpack.c.l.b16 %v221
    %v432 = vunpack.c.h.b16 %v221
    %v433 = vunpack.c.l.b16 %v222
    %v434 = vunpack.c.l.b16 %v223
    %v435 = vunpack.c.h.b16 %v223
    %v436 = vunpack.c.l.b16 %v224
    %v437 = vunpack.c.l.b16 %v225
    %v438 = vunpack.c.h.b16 %v225
    %v439 = vunpack.c.l.b16 %v226
    %v440 = vunpack.c.l.b16 %v227
    %v441 = vunpack.c.h.b16 %v227
    %v442 = vunpack.c.l.b16 %v228
    %v443 = vunpack.c.l.b16 %v229
    %v444 = vunpack.c.h.b16 %v229
    %v445 = vunpack.c.l.b16 %v230
    %v446 = vunpack.c.l.b16 %v231
    %v447 = vunpack.c.h.b16 %v231
    %v448 = vunpack.c.l.b16 %v232
    %v449 = vunpack.c.l.b16 %v233
    %v450 = vunpack.c.h.b16 %v233
    %v451 = vunpack.c.l.b16 %v234
    %v452 = vunpack.c.l.b16 %v235
    %v453 = vunpack.c.h.b16 %v235
    %v454 = vunpack.c.l.b16 %v236
    %v455 = vunpack.c.l.b16 %v237
    %v456 = vunpack.c.h.b16 %v237
    %v457 = vunpack.c.l.b16 %v238
    %v458 = vunpack.c.l.b16 %v239
    %v459 = vunpack.c.h.b16 %v239
    %v460 = vunpack.c.l.b16 %v240
    %v461 = vunpack.c.l.b16 %v241
    %v462 = vunpack.c.h.b16 %v241
    %v463 = vunpack.c.l.b16 %v242
    %v464 = vunpack.c.l.b16 %v243
    %v465 = vunpack.c.h.b16 %v243
    %v466 = vunpack.c.l.b16 %v244
    %v467 = vunpack.c.l.b16 %v245
    %v468 = vunpack.c.h.b16 %v245
    %v469 = vunpack.c.l.b16 %v246
    %v470 = vunpack.c.l.b16 %v247
    %v471 = vunpack.c.h.b16 %v247
    %v472 = vunpack.c.l.b16 %v248
    %v473 = vunpack.c.l.b16 %v249
    %v474 = vunpack.c.h.b16 %v249
    %v475 = vunpack.c.l.b16 %v250
    %v476 = vunpack.c.l.b16 %v251
    %v477 = vunpack.c.h.b16 %v251
    %v478 = vunpack.c.l.b16 %v252
    %v479 = vunpack.c.l.b16 %v253
    %v480 = vunpack.c.h.b16 %v253
    %v481 = vunpack.c.l.b16 %v254
    %v482 = vunpack.c.l.b16 %v255
    %v483 = vunpack.c.h.b16 %v255
    %v484 = vunpack.c.l.b16 %v256
    %v485 = vunpack.c.l.b16 %v257
    %v486 = vunpack.c.h.b16 %v257
    %v487 = vunpack.c.l.b16 %v258
    %v488 = vunpack.c.l.b16 %v259
    %v489 = vunpack.c.h.b16 %v259
    %v490 = vunpack.c.l.b16 %v260
    %v491 = vunpack.c.l.b16 %v261
    %v492 = vunpack.c.h.b16 %v261
    %v493 = vunpack.c.l.b16 %v262
    %v494 = vunpack.c.l.b16 %v263
    %v495 = vunpack.c.h.b16 %v263
    %v496 = vunpack.c.l.b16 %v264
    %v497 = vunpack.c.l.b16 %v265
    %v498 = vunpack.c.h.b16 %v265
    %v499 = vunpack.c.l.b16 %v266
    %v500 = vunpack.c.l.b16 %v267
    %v501 = vunpack.c.h.b16 %v267
    %v502 = vunpack.c.l.b16 %v268
    %v503 = vunpack.c.l.b16 %v269
    %v504 = vunpack.c.h.b16 %v269
    %v505 = vunpack.c.l.b16 %v270
    %v506 = vunpack.c.l.b16 %v271
    %v507 = vunpack.c.h.b16 %v271
    %v508 = vunpack.c.l.b16 %v272
    %v509 = vunpack.c.l.b16 %v273
    %v510 = vunpack.c.h.b16 %v273
    %v511 = vunpack.c.l.b16 %v274
    %v512 = vunpack.c.l.b16 %v275
    %v513 = vunpack.c.h.b16 %v275
    %v514 = vunpack.c.l.b16 %v276
    %v515 = vunpack.c.l.b16 %v277
    %v516 = vunpack.c.h.b16 %v277
    %v517 = vunpack.c.l.b16 %v278
    %v518 = vunpack.c.l.b16 %v279
    %v519 = vunpack.c.h.b16 %v279
    %v520 = vunpack.c.l.b16 %v280
    %v521 = vpack.c.b16 %v380, %v377
    %v522 = vpack.c.b16 %v381, %v378
    %v523 = vpack.c.b16 %v382, %v379
    %v524 = vpack.c.b16 %v386, %v383
    %v525 = vpack.c.b16 %v387, %v384
    %v526 = vpack.c.b16 %v388, %v385
    %v527 = vpack.c.b16 %v392, %v389
    %v528 = vpack.c.b16 %v393, %v390
    %v529 = vpack.c.b16 %v394, %v391
    %v530 = vpack.c.b16 %v398, %v395
    %v531 = vpack.c.b16 %v399, %v396
    %v532 = vpack.c.b16 %v400, %v397
    %v533 = vpack.c.b16 %v404, %v401
    %v534 = vpack.c.b16 %v405, %v402
    %v535 = vpack.c.b16 %v406, %v403
    %v536 = vpack.c.b16 %v410, %v407
    %v537 = vpack.c.b16 %v411, %v408
    %v538 = vpack.c.b16 %v412, %v409
    %v539 = vpack.c.b16 %v416, %v413
    %v540 = vpack.c.b16 %v417, %v414
    %v541 = vpack.c.b16 %v418, %v415
    %v542 = vpack.c.b16 %v422, %v419
    %v543 = vpack.c.b16 %v423, %v420
    %v544 = vpack.c.b16 %v424, %v421
    %v545 = vpack.c.b16 %v428, %v425
    %v546 = vpack.c.b16 %v429, %v426
    %v547 = vpack.c.b16 %v430, %v427
    %v548 = vpack.c.b16 %v434, %v431
    %v549 = vpack.c.b16 %v435, %v432
    %v550 = vpack.c.b16 %v436, %v433
    %v551 = vpack.c.b16 %v440, %v437
    %v552 = vpack.c.b16 %v441, %v438
    %v553 = vpack.c.b16 %v442, %v439
    %v554 = vpack.c.b16 %v446, %v443
    %v555 = vpack.c.b16 %v447, %v444
    %v556 = vpack.c.b16 %v448, %v445
    %v557 = vpack.c.b16 %v452, %v449
    %v558 = vpack.c.b16 %v453, %v450
    %v559 = vpack.c.b16 %v454, %v451
    %v560 = vpack.c.b16 %v458, %v455
    %v561 = vpack.c.b16 %v459, %v456
    %v562 = vpack.c.b16 %v460, %v457
    %v563 = vpack.c.b16 %v464, %v461
    %v564 = vpack.c.b16 %v465, %v462
    %v565 = vpack.c.b16 %v466, %v463
    %v566 = vpack.c.b16 %v470, %v467
    %v567 = vpack.c.b16 %v471, %v468
    %v568 = vpack.c.b16 %v472, %v469
    %v569 = vpack.c.b16 %v476, %v473
    %v570 = vpack.c.b16 %v477, %v474
    %v571 = vpack.c.b16 %v478, %v475
    %v572 = vpack.c.b16 %v482, %v479
    %v573 = vpack.c.b16 %v483, %v480
    %v574 = vpack.c.b16 %v484, %v481
    %v575 = vpack.c.b16 %v488, %v485
    %v576 = vpack.c.b16 %v489, %v486
    %v577 = vpack.c.b16 %v490, %v487
    %v578 = vpack.c.b16 %v494, %v491
    %v579 = vpack.c.b16 %v495, %v492
    %v580 = vpack.c.b16 %v496, %v493
    %v581 = vpack.c.b16 %v500, %v497
    %v582 = vpack.c.b16 %v501, %v498
    %v583 = vpack.c.b16 %v502, %v499
    %v584 = vpack.c.b16 %v506, %v503
    %v585 = vpack.c.b16 %v507, %v504
    %v586 = vpack.c.b16 %v508, %v505
    %v587 = vpack.c.b16 %v512, %v509
    %v588 = vpack.c.b16 %v513, %v510
    %v589 = vpack.c.b16 %v514, %v511
    %v590 = vpack.c.b16 %v518, %v515
    %v591 = vpack.c.b16 %v519, %v516
    %v592 = vpack.c.b16 %v520, %v517
    %665 = vmatprep.subr.bf16.mxu0 %v522
    %666 = vmatpush1.bf16.msra.mxu0 %v521
    %667 = vmatprep.subr.bf16.mxu0 %v525
    %668 = vmatpush1.bf16.msra.mxu0 %v524
    %669 = vmatprep.subr.bf16.mxu0 %v528
    %670 = vmatpush1.bf16.msra.mxu0 %v527
    %671 = vmatprep.subr.bf16.mxu0 %v531
    %672 = vmatpush1.bf16.msra.mxu0 %v530
    %673 = vmatprep.subr.bf16.mxu0 %v534
    %674 = vmatpush1.bf16.msra.mxu0 %v533
    %675 = vmatprep.subr.bf16.mxu0 %v537
    %676 = vmatpush1.bf16.msra.mxu0 %v536
    %677 = vmatprep.subr.bf16.mxu0 %v540
    %678 = vmatpush1.bf16.msra.mxu0 %v539
    %679 = vmatprep.subr.bf16.mxu0 %v543
    %680 = vmatpush1.bf16.msra.mxu0 %v542
    %681 = vmatprep.subr.bf16.mxu0 %v546
    %682 = vmatpush1.bf16.msra.mxu0 %v545
    %683 = vmatprep.subr.bf16.mxu0 %v549
    %684 = vmatpush1.bf16.msra.mxu0 %v548
    %685 = vmatprep.subr.bf16.mxu0 %v552
    %686 = vmatpush1.bf16.msra.mxu0 %v551
    %687 = vmatprep.subr.bf16.mxu0 %v555
    %688 = vmatpush1.bf16.msra.mxu0 %v554
    %689 = vmatprep.subr.bf16.mxu0 %v558
    %690 = vmatpush1.bf16.msra.mxu0 %v557
    %691 = vmatprep.subr.bf16.mxu0 %v561
    %692 = vmatpush1.bf16.msra.mxu0 %v560
    %693 = vmatprep.subr.bf16.mxu0 %v564
    %694 = vmatpush1.bf16.msra.mxu0 %v563
    %695 = vmatprep.subr.bf16.mxu0 %v567
    %696 = vmatpush1.bf16.msra.mxu0 %v566
    %697 = vmatprep.mubr.bf16.mxu0 %v138
    %698 = vmatmul.mubr.bf16.gmra.mrb[0].mxu0 %v137
    %v699 = vpop.f32.mrb[0].mxu0
    %v700 = vadd.f32 0.0, %v699
    %v701 = vpop.f32.mrb[0].mxu0
    %v702 = vadd.f32 0.0, %v701
    %v703 = vpop.f32.mrb[0].mxu0
    %v704 = vadd.f32 0.0, %v703
    %v705 = vpop.f32.mrb[0].mxu0
    %v706 = vadd.f32 0.0, %v705
    %707 = vmatprep.mubr.bf16.mxu0 %v141
    %708 = vmatmul.mubr.bf16.gmra.mrb[0].mxu0 %v140
    %v709 = vpop.f32.mrb[0].mxu0
    %v710 = vadd.f32 0.0, %v709
    %v711 = vpop.f32.mrb[0].mxu0
    %v712 = vadd.f32 0.0, %v711
    %v713 = vpop.f32.mrb[0].mxu0
    %v714 = vadd.f32 0.0, %v713
    %v715 = vpop.f32.mrb[0].mxu0
    %v716 = vadd.f32 0.0, %v715
    %717 = vmatprep.mubr.bf16.mxu0 %v144
    %718 = vmatmul.mubr.bf16.gmra.mrb[0].mxu0 %v143
    %v719 = vpop.f32.mrb[0].mxu0
    %v720 = vadd.f32 0.0, %v719
    %v721 = vpop.f32.mrb[0].mxu0
    %v722 = vadd.f32 0.0, %v721
    %v723 = vpop.f32.mrb[0].mxu0
    %v724 = vadd.f32 0.0, %v723
    %v725 = vpop.f32.mrb[0].mxu0
    %v726 = vadd.f32 0.0, %v725
    %727 = vmatprep.mubr.bf16.mxu0 %v147
    %728 = vmatmul.mubr.bf16.gmra.mrb[0].mxu0 %v146
    %v729 = vpop.f32.mrb[0].mxu0
    %v730 = vadd.f32 0.0, %v729
    %v731 = vpop.f32.mrb[0].mxu0
    %v732 = vadd.f32 0.0, %v731
    %v733 = vpop.f32.mrb[0].mxu0
    %v734 = vadd.f32 0.0, %v733
    %v735 = vpop.f32.mrb[0].mxu0
    %v736 = vadd.f32 0.0, %v735
    %737 = vmatprep.mubr.bf16.mxu0 %v150
    %738 = vmatmul.mubr.bf16.gmra.mrb[0].mxu0 %v149
    %v739 = vpop.f32.mrb[0].mxu0
    %v740 = vadd.f32 0.0, %v739
    %v741 = vpop.f32.mrb[0].mxu0
    %v742 = vadd.f32 0.0, %v741
    %v743 = vpop.f32.mrb[0].mxu0
    %v744 = vadd.f32 0.0, %v743
    %v745 = vpop.f32.mrb[0].mxu0
    %v746 = vadd.f32 0.0, %v745
    %747 = vmatprep.mubr.bf16.mxu0 %v153
    %748 = vmatmul.mubr.bf16.gmra.mrb[0].mxu0 %v152
    %v749 = vpop.f32.mrb[0].mxu0
    %v750 = vadd.f32 0.0, %v749
    %v751 = vpop.f32.mrb[0].mxu0
    %v752 = vadd.f32 0.0, %v751
    %v753 = vpop.f32.mrb[0].mxu0
    %v754 = vadd.f32 0.0, %v753
    %v755 = vpop.f32.mrb[0].mxu0
    %v756 = vadd.f32 0.0, %v755
    %757 = vmatprep.mubr.bf16.mxu0 %v156
    %758 = vmatmul.mubr.bf16.gmra.mrb[0].mxu0 %v155
    %v759 = vpop.f32.mrb[0].mxu0
    %v760 = vadd.f32 0.0, %v759
    %v761 = vpop.f32.mrb[0].mxu0
    %v762 = vadd.f32 0.0, %v761
    %v763 = vpop.f32.mrb[0].mxu0
    %v764 = vadd.f32 0.0, %v763
    %v765 = vpop.f32.mrb[0].mxu0
    %v766 = vadd.f32 0.0, %v765
    %767 = vmatprep.mubr.bf16.mxu0 %v159
    %768 = vmatmul.mubr.bf16.gmra.mrb[0].mxu0 %v158
    %v769 = vpop.f32.mrb[0].mxu0
    %v770 = vadd.f32 0.0, %v769
    %v771 = vpop.f32.mrb[0].mxu0
    %v772 = vadd.f32 0.0, %v771
    %v773 = vpop.f32.mrb[0].mxu0
    %v774 = vadd.f32 0.0, %v773
    %v775 = vpop.f32.mrb[0].mxu0
    %v776 = vadd.f32 0.0, %v775
    %777 = vmatprep.mubr.bf16.mxu0 %v162
    %778 = vmatmul.mubr.bf16.gmra.mrb[0].mxu0 %v161
    %v779 = vpop.f32.mrb[0].mxu0
    %v780 = vadd.f32 0.0, %v779
    %v781 = vpop.f32.mrb[0].mxu0
    %v782 = vadd.f32 0.0, %v781
    %v783 = vpop.f32.mrb[0].mxu0
    %v784 = vadd.f32 0.0, %v783
    %v785 = vpop.f32.mrb[0].mxu0
    %v786 = vadd.f32 0.0, %v785
    %787 = vmatprep.mubr.bf16.mxu0 %v165
    %788 = vmatmul.mubr.bf16.gmra.mrb[0].mxu0 %v164
    %v789 = vpop.f32.mrb[0].mxu0
    %v790 = vadd.f32 0.0, %v789
    %v791 = vpop.f32.mrb[0].mxu0
    %v792 = vadd.f32 0.0, %v791
    %v793 = vpop.f32.mrb[0].mxu0
    %v794 = vadd.f32 0.0, %v793
    %v795 = vpop.f32.mrb[0].mxu0
    %v796 = vadd.f32 0.0, %v795
    %797 = vmatprep.mubr.bf16.mxu0 %v168
    %798 = vmatmul.mubr.bf16.gmra.mrb[0].mxu0 %v167
    %v799 = vpop.f32.mrb[0].mxu0
    %v800 = vadd.f32 0.0, %v799
    %v801 = vpop.f32.mrb[0].mxu0
    %v802 = vadd.f32 0.0, %v801
    %v803 = vpop.f32.mrb[0].mxu0
    %v804 = vadd.f32 0.0, %v803
    %v805 = vpop.f32.mrb[0].mxu0
    %v806 = vadd.f32 0.0, %v805
    %807 = vmatprep.mubr.bf16.mxu0 %v171
    %808 = vmatmul.mubr.bf16.gmra.mrb[0].mxu0 %v170
    %v809 = vpop.f32.mrb[0].mxu0
    %v810 = vadd.f32 0.0, %v809
    %v811 = vpop.f32.mrb[0].mxu0
    %v812 = vadd.f32 0.0, %v811
    %v813 = vpop.f32.mrb[0].mxu0
    %v814 = vadd.f32 0.0, %v813
    %v815 = vpop.f32.mrb[0].mxu0
    %v816 = vadd.f32 0.0, %v815
    %817 = vmatprep.mubr.bf16.mxu0 %v174
    %818 = vmatmul.mubr.bf16.gmra.mrb[0].mxu0 %v173
    %v819 = vpop.f32.mrb[0].mxu0
    %v820 = vadd.f32 0.0, %v819
    %v821 = vpop.f32.mrb[0].mxu0
    %v822 = vadd.f32 0.0, %v821
    %v823 = vpop.f32.mrb[0].mxu0
    %v824 = vadd.f32 0.0, %v823
    %v825 = vpop.f32.mrb[0].mxu0
    %v826 = vadd.f32 0.0, %v825
    %827 = vmatprep.mubr.bf16.mxu0 %v177
    %828 = vmatmul.mubr.bf16.gmra.mrb[0].mxu0 %v176
    %v829 = vpop.f32.mrb[0].mxu0
    %v830 = vadd.f32 0.0, %v829
    %v831 = vpop.f32.mrb[0].mxu0
    %v832 = vadd.f32 0.0, %v831
    %v833 = vpop.f32.mrb[0].mxu0
    %v834 = vadd.f32 0.0, %v833
    %v835 = vpop.f32.mrb[0].mxu0
    %v836 = vadd.f32 0.0, %v835
    %837 = vmatprep.mubr.bf16.mxu0 %v180
    %838 = vmatmul.mubr.bf16.gmra.mrb[0].mxu0 %v179
    %v839 = vpop.f32.mrb[0].mxu0
    %v840 = vadd.f32 0.0, %v839
    %v841 = vpop.f32.mrb[0].mxu0
    %v842 = vadd.f32 0.0, %v841
    %v843 = vpop.f32.mrb[0].mxu0
    %v844 = vadd.f32 0.0, %v843
    %v845 = vpop.f32.mrb[0].mxu0
    %v846 = vadd.f32 0.0, %v845
    %847 = vmatprep.mubr.bf16.mxu0 %v183
    %848 = vmatmul.mubr.bf16.gmra.mrb[0].mxu0 %v182
    %v849 = vpop.f32.mrb[0].mxu0
    %v850 = vadd.f32 0.0, %v849
    %v851 = vpop.f32.mrb[0].mxu0
    %v852 = vadd.f32 0.0, %v851
    %v853 = vpop.f32.mrb[0].mxu0
    %v854 = vadd.f32 0.0, %v853
    %v855 = vpop.f32.mrb[0].mxu0
    %v856 = vadd.f32 0.0, %v855
    %857 = vdwg.mxu0
    %858 = vmatprep.subr.bf16.mxu0 %v570
    %859 = vmatpush1.bf16.msra.mxu0 %v569
    %860 = vmatprep.subr.bf16.mxu0 %v573
    %861 = vmatpush1.bf16.msra.mxu0 %v572
    %862 = vmatprep.subr.bf16.mxu0 %v576
    %863 = vmatpush1.bf16.msra.mxu0 %v575
    %864 = vmatprep.subr.bf16.mxu0 %v579
    %865 = vmatpush1.bf16.msra.mxu0 %v578
    %866 = vmatprep.subr.bf16.mxu0 %v582
    %867 = vmatpush1.bf16.msra.mxu0 %v581
    %868 = vmatprep.subr.bf16.mxu0 %v585
    %869 = vmatpush1.bf16.msra.mxu0 %v584
    %870 = vmatprep.subr.bf16.mxu0 %v588
    %871 = vmatpush1.bf16.msra.mxu0 %v587
    %872 = vmatprep.subr.bf16.mxu0 %v591
    %873 = vmatpush1.bf16.msra.mxu0 %v590
    %874 = vmatprep.subr.bf16.mxu0 0
    %875 = vmatpush1.bf16.msra.mxu0 0
    %876 = vmatprep.subr.bf16.mxu0 0
    %877 = vmatpush1.bf16.msra.mxu0 0
    %878 = vmatprep.subr.bf16.mxu0 0
    %879 = vmatpush1.bf16.msra.mxu0 0
    %880 = vmatprep.subr.bf16.mxu0 0
    %881 = vmatpush1.bf16.msra.mxu0 0
    %882 = vmatprep.subr.bf16.mxu0 0
    %883 = vmatpush1.bf16.msra.mxu0 0
    %884 = vmatprep.subr.bf16.mxu0 0
    %885 = vmatpush1.bf16.msra.mxu0 0
    %886 = vmatprep.subr.bf16.mxu0 0
    %887 = vmatpush1.bf16.msra.mxu0 0
    %888 = vmatprep.subr.bf16.mxu0 0
    %889 = vmatpush1.bf16.msra.mxu0 0
    %890 = vmatprep.mubr.bf16.mxu0 0
    %891 = vmatmul.mubr.bf16.gmra.mrb[0].mxu0 %v139
    %v892 = vpop.f32.mrb[0].mxu0
    %v893 = vadd.f32 %v700, %v892
    %v894 = vpop.f32.mrb[0].mxu0
    %v895 = vadd.f32 %v702, %v894
    %v896 = vpop.f32.mrb[0].mxu0
    %v897 = vadd.f32 %v704, %v896
    %v898 = vpop.f32.mrb[0].mxu0
    %v899 = vadd.f32 %v706, %v898
    %900 = vmatprep.mubr.bf16.mxu0 0
    %901 = vmatmul.mubr.bf16.gmra.mrb[0].mxu0 %v142
    %v902 = vpop.f32.mrb[0].mxu0
    %v903 = vadd.f32 %v710, %v902
    %v904 = vpop.f32.mrb[0].mxu0
    %v905 = vadd.f32 %v712, %v904
    %v906 = vpop.f32.mrb[0].mxu0
    %v907 = vadd.f32 %v714, %v906
    %v908 = vpop.f32.mrb[0].mxu0
    %v909 = vadd.f32 %v716, %v908
    %910 = vmatprep.mubr.bf16.mxu0 0
    %911 = vmatmul.mubr.bf16.gmra.mrb[0].mxu0 %v145
    %v912 = vpop.f32.mrb[0].mxu0
    %v913 = vadd.f32 %v720, %v912
    %v914 = vpop.f32.mrb[0].mxu0
    %v915 = vadd.f32 %v722, %v914
    %v916 = vpop.f32.mrb[0].mxu0
    %v917 = vadd.f32 %v724, %v916
    %v918 = vpop.f32.mrb[0].mxu0
    %v919 = vadd.f32 %v726, %v918
    %920 = vmatprep.mubr.bf16.mxu0 0
    %921 = vmatmul.mubr.bf16.gmra.mrb[0].mxu0 %v148
    %v922 = vpop.f32.mrb[0].mxu0
    %v923 = vadd.f32 %v730, %v922
    %v924 = vpop.f32.mrb[0].mxu0
    %v925 = vadd.f32 %v732, %v924
    %v926 = vpop.f32.mrb[0].mxu0
    %v927 = vadd.f32 %v734, %v926
    %v928 = vpop.f32.mrb[0].mxu0
    %v929 = vadd.f32 %v736, %v928
    %930 = vmatprep.mubr.bf16.mxu0 0
    %931 = vmatmul.mubr.bf16.gmra.mrb[0].mxu0 %v151
    %v932 = vpop.f32.mrb[0].mxu0
    %v933 = vadd.f32 %v740, %v932
    %v934 = vpop.f32.mrb[0].mxu0
    %v935 = vadd.f32 %v742, %v934
    %v936 = vpop.f32.mrb[0].mxu0
    %v937 = vadd.f32 %v744, %v936
    %v938 = vpop.f32.mrb[0].mxu0
    %v939 = vadd.f32 %v746, %v938
    %940 = vmatprep.mubr.bf16.mxu0 0
    %941 = vmatmul.mubr.bf16.gmra.mrb[0].mxu0 %v154
    %v942 = vpop.f32.mrb[0].mxu0
    %v943 = vadd.f32 %v750, %v942
    %v944 = vpop.f32.mrb[0].mxu0
    %v945 = vadd.f32 %v752, %v944
    %v946 = vpop.f32.mrb[0].mxu0
    %v947 = vadd.f32 %v754, %v946
    %v948 = vpop.f32.mrb[0].mxu0
    %v949 = vadd.f32 %v756, %v948
    %950 = vmatprep.mubr.bf16.mxu0 0
    %951 = vmatmul.mubr.bf16.gmra.mrb[0].mxu0 %v157
    %v952 = vpop.f32.mrb[0].mxu0
    %v953 = vadd.f32 %v760, %v952
    %v954 = vpop.f32.mrb[0].mxu0
    %v955 = vadd.f32 %v762, %v954
    %v956 = vpop.f32.mrb[0].mxu0
    %v957 = vadd.f32 %v764, %v956
    %v958 = vpop.f32.mrb[0].mxu0
    %v959 = vadd.f32 %v766, %v958
    %960 = vmatprep.mubr.bf16.mxu0 0
    %961 = vmatmul.mubr.bf16.gmra.mrb[0].mxu0 %v160
    %v962 = vpop.f32.mrb[0].mxu0
    %v963 = vadd.f32 %v770, %v962
    %v964 = vpop.f32.mrb[0].mxu0
    %v965 = vadd.f32 %v772, %v964
    %v966 = vpop.f32.mrb[0].mxu0
    %v967 = vadd.f32 %v774, %v966
    %v968 = vpop.f32.mrb[0].mxu0
    %v969 = vadd.f32 %v776, %v968
    %970 = vmatprep.mubr.bf16.mxu0 0
    %971 = vmatmul.mubr.bf16.gmra.mrb[0].mxu0 %v163
    %v972 = vpop.f32.mrb[0].mxu0
    %v973 = vadd.f32 %v780, %v972
    %v974 = vpop.f32.mrb[0].mxu0
    %v975 = vadd.f32 %v782, %v974
    %v976 = vpop.f32.mrb[0].mxu0
    %v977 = vadd.f32 %v784, %v976
    %v978 = vpop.f32.mrb[0].mxu0
    %v979 = vadd.f32 %v786, %v978
    %980 = vmatprep.mubr.bf16.mxu0 0
    %981 = vmatmul.mubr.bf16.gmra.mrb[0].mxu0 %v166
    %v982 = vpop.f32.mrb[0].mxu0
    %v983 = vadd.f32 %v790, %v982
    %v984 = vpop.f32.mrb[0].mxu0
    %v985 = vadd.f32 %v792, %v984
    %v986 = vpop.f32.mrb[0].mxu0
    %v987 = vadd.f32 %v794, %v986
    %v988 = vpop.f32.mrb[0].mxu0
    %v989 = vadd.f32 %v796, %v988
    %990 = vmatprep.mubr.bf16.mxu0 0
    %991 = vmatmul.mubr.bf16.gmra.mrb[0].mxu0 %v169
    %v992 = vpop.f32.mrb[0].mxu0
    %v993 = vadd.f32 %v800, %v992
    %v994 = vpop.f32.mrb[0].mxu0
    %v995 = vadd.f32 %v802, %v994
    %v996 = vpop.f32.mrb[0].mxu0
    %v997 = vadd.f32 %v804, %v996
    %v998 = vpop.f32.mrb[0].mxu0
    %v999 = vadd.f32 %v806, %v998
    %1000 = vmatprep.mubr.bf16.mxu0 0
    %1001 = vmatmul.mubr.bf16.gmra.mrb[0].mxu0 %v172
    %v1002 = vpop.f32.mrb[0].mxu0
    %v1003 = vadd.f32 %v810, %v1002
    %v1004 = vpop.f32.mrb[0].mxu0
    %v1005 = vadd.f32 %v812, %v1004
    %v1006 = vpop.f32.mrb[0].mxu0
    %v1007 = vadd.f32 %v814, %v1006
    %v1008 = vpop.f32.mrb[0].mxu0
    %v1009 = vadd.f32 %v816, %v1008
    %1010 = vmatprep.mubr.bf16.mxu0 0
    %1011 = vmatmul.mubr.bf16.gmra.mrb[0].mxu0 %v175
    %v1012 = vpop.f32.mrb[0].mxu0
    %v1013 = vadd.f32 %v820, %v1012
    %v1014 = vpop.f32.mrb[0].mxu0
    %v1015 = vadd.f32 %v822, %v1014
    %v1016 = vpop.f32.mrb[0].mxu0
    %v1017 = vadd.f32 %v824, %v1016
    %v1018 = vpop.f32.mrb[0].mxu0
    %v1019 = vadd.f32 %v826, %v1018
    %1020 = vmatprep.mubr.bf16.mxu0 0
    %1021 = vmatmul.mubr.bf16.gmra.mrb[0].mxu0 %v178
    %v1022 = vpop.f32.mrb[0].mxu0
    %v1023 = vadd.f32 %v830, %v1022
    %v1024 = vpop.f32.mrb[0].mxu0
    %v1025 = vadd.f32 %v832, %v1024
    %v1026 = vpop.f32.mrb[0].mxu0
    %v1027 = vadd.f32 %v834, %v1026
    %v1028 = vpop.f32.mrb[0].mxu0
    %v1029 = vadd.f32 %v836, %v1028
    %1030 = vmatprep.mubr.bf16.mxu0 0
    %1031 = vmatmul.mubr.bf16.gmra.mrb[0].mxu0 %v181
    %v1032 = vpop.f32.mrb[0].mxu0
    %v1033 = vadd.f32 %v840, %v1032
    %v1034 = vpop.f32.mrb[0].mxu0
    %v1035 = vadd.f32 %v842, %v1034
    %v1036 = vpop.f32.mrb[0].mxu0
    %v1037 = vadd.f32 %v844, %v1036
    %v1038 = vpop.f32.mrb[0].mxu0
    %v1039 = vadd.f32 %v846, %v1038
    %1040 = vmatprep.mubr.bf16.mxu0 0
    %1041 = vmatmul.mubr.bf16.gmra.mrb[0].mxu0 %v184
    %v1042 = vpop.f32.mrb[0].mxu0
    %v1043 = vadd.f32 %v850, %v1042
    %v1044 = vpop.f32.mrb[0].mxu0
    %v1045 = vadd.f32 %v852, %v1044
    %v1046 = vpop.f32.mrb[0].mxu0
    %v1047 = vadd.f32 %v854, %v1046
    %v1048 = vpop.f32.mrb[0].mxu0
    %v1049 = vadd.f32 %v856, %v1048
    %1050 = vdwg.mxu0
    %1051 = vmatprep.subr.bf16.mxu0 0
    %1052 = vmatpush1.bf16.msra.mxu0 %v523
    %1053 = vmatprep.subr.bf16.mxu0 0
    %1054 = vmatpush1.bf16.msra.mxu0 %v526
    %1055 = vmatprep.subr.bf16.mxu0 0
    %1056 = vmatpush1.bf16.msra.mxu0 %v529
    %1057 = vmatprep.subr.bf16.mxu0 0
    %1058 = vmatpush1.bf16.msra.mxu0 %v532
    %1059 = vmatprep.subr.bf16.mxu0 0
    %1060 = vmatpush1.bf16.msra.mxu0 %v535
    %1061 = vmatprep.subr.bf16.mxu0 0
    %1062 = vmatpush1.bf16.msra.mxu0 %v538
    %1063 = vmatprep.subr.bf16.mxu0 0
    %1064 = vmatpush1.bf16.msra.mxu0 %v541
    %1065 = vmatprep.subr.bf16.mxu0 0
    %1066 = vmatpush1.bf16.msra.mxu0 %v544
    %1067 = vmatprep.subr.bf16.mxu0 0
    %1068 = vmatpush1.bf16.msra.mxu0 %v547
    %1069 = vmatprep.subr.bf16.mxu0 0
    %1070 = vmatpush1.bf16.msra.mxu0 %v550
    %1071 = vmatprep.subr.bf16.mxu0 0
    %1072 = vmatpush1.bf16.msra.mxu0 %v553
    %1073 = vmatprep.subr.bf16.mxu0 0
    %1074 = vmatpush1.bf16.msra.mxu0 %v556
    %1075 = vmatprep.subr.bf16.mxu0 0
    %1076 = vmatpush1.bf16.msra.mxu0 %v559
    %1077 = vmatprep.subr.bf16.mxu0 0
    %1078 = vmatpush1.bf16.msra.mxu0 %v562
    %1079 = vmatprep.subr.bf16.mxu0 0
    %1080 = vmatpush1.bf16.msra.mxu0 %v565
    %1081 = vmatprep.subr.bf16.mxu0 0
    %1082 = vmatpush1.bf16.msra.mxu0 %v568
    %1083 = vmatprep.mubr.bf16.mxu0 %v138
    %1084 = vmatmul.mubr.bf16.gmra.mrb[0].mxu0 %v137
    %v1085 = vpop.f32.mrb[0].mxu0
    %v1086 = vadd.f32 0.0, %v1085
    %v1087 = vpop.f32.mrb[0].mxu0
    %v1088 = vpop.f32.mrb[0].mxu0
    %v1089 = vadd.f32 0.0, %v1088
    %v1090 = vpop.f32.mrb[0].mxu0
    %1091 = vmatprep.mubr.bf16.mxu0 %v141
    %1092 = vmatmul.mubr.bf16.gmra.mrb[0].mxu0 %v140
    %v1093 = vpop.f32.mrb[0].mxu0
    %v1094 = vadd.f32 0.0, %v1093
    %v1095 = vpop.f32.mrb[0].mxu0
    %v1096 = vpop.f32.mrb[0].mxu0
    %v1097 = vadd.f32 0.0, %v1096
    %v1098 = vpop.f32.mrb[0].mxu0
    %1099 = vmatprep.mubr.bf16.mxu0 %v144
    %1100 = vmatmul.mubr.bf16.gmra.mrb[0].mxu0 %v143
    %v1101 = vpop.f32.mrb[0].mxu0
    %v1102 = vadd.f32 0.0, %v1101
    %v1103 = vpop.f32.mrb[0].mxu0
    %v1104 = vpop.f32.mrb[0].mxu0
    %v1105 = vadd.f32 0.0, %v1104
    %v1106 = vpop.f32.mrb[0].mxu0
    %1107 = vmatprep.mubr.bf16.mxu0 %v147
    %1108 = vmatmul.mubr.bf16.gmra.mrb[0].mxu0 %v146
    %v1109 = vpop.f32.mrb[0].mxu0
    %v1110 = vadd.f32 0.0, %v1109
    %v1111 = vpop.f32.mrb[0].mxu0
    %v1112 = vpop.f32.mrb[0].mxu0
    %v1113 = vadd.f32 0.0, %v1112
    %v1114 = vpop.f32.mrb[0].mxu0
    %1115 = vmatprep.mubr.bf16.mxu0 %v150
    %1116 = vmatmul.mubr.bf16.gmra.mrb[0].mxu0 %v149
    %v1117 = vpop.f32.mrb[0].mxu0
    %v1118 = vadd.f32 0.0, %v1117
    %v1119 = vpop.f32.mrb[0].mxu0
    %v1120 = vpop.f32.mrb[0].mxu0
    %v1121 = vadd.f32 0.0, %v1120
    %v1122 = vpop.f32.mrb[0].mxu0
    %1123 = vmatprep.mubr.bf16.mxu0 %v153
    %1124 = vmatmul.mubr.bf16.gmra.mrb[0].mxu0 %v152
    %v1125 = vpop.f32.mrb[0].mxu0
    %v1126 = vadd.f32 0.0, %v1125
    %v1127 = vpop.f32.mrb[0].mxu0
    %v1128 = vpop.f32.mrb[0].mxu0
    %v1129 = vadd.f32 0.0, %v1128
    %v1130 = vpop.f32.mrb[0].mxu0
    %1131 = vmatprep.mubr.bf16.mxu0 %v156
    %1132 = vmatmul.mubr.bf16.gmra.mrb[0].mxu0 %v155
    %v1133 = vpop.f32.mrb[0].mxu0
    %v1134 = vadd.f32 0.0, %v1133
    %v1135 = vpop.f32.mrb[0].mxu0
    %v1136 = vpop.f32.mrb[0].mxu0
    %v1137 = vadd.f32 0.0, %v1136
    %v1138 = vpop.f32.mrb[0].mxu0
    %1139 = vmatprep.mubr.bf16.mxu0 %v159
    %1140 = vmatmul.mubr.bf16.gmra.mrb[0].mxu0 %v158
    %v1141 = vpop.f32.mrb[0].mxu0
    %v1142 = vadd.f32 0.0, %v1141
    %v1143 = vpop.f32.mrb[0].mxu0
    %v1144 = vpop.f32.mrb[0].mxu0
    %v1145 = vadd.f32 0.0, %v1144
    %v1146 = vpop.f32.mrb[0].mxu0
    %1147 = vmatprep.mubr.bf16.mxu0 %v162
    %1148 = vmatmul.mubr.bf16.gmra.mrb[0].mxu0 %v161
    %v1149 = vpop.f32.mrb[0].mxu0
    %v1150 = vadd.f32 0.0, %v1149
    %v1151 = vpop.f32.mrb[0].mxu0
    %v1152 = vpop.f32.mrb[0].mxu0
    %v1153 = vadd.f32 0.0, %v1152
    %v1154 = vpop.f32.mrb[0].mxu0
    %1155 = vmatprep.mubr.bf16.mxu0 %v165
    %1156 = vmatmul.mubr.bf16.gmra.mrb[0].mxu0 %v164
    %v1157 = vpop.f32.mrb[0].mxu0
    %v1158 = vadd.f32 0.0, %v1157
    %v1159 = vpop.f32.mrb[0].mxu0
    %v1160 = vpop.f32.mrb[0].mxu0
    %v1161 = vadd.f32 0.0, %v1160
    %v1162 = vpop.f32.mrb[0].mxu0
    %1163 = vmatprep.mubr.bf16.mxu0 %v168
    %1164 = vmatmul.mubr.bf16.gmra.mrb[0].mxu0 %v167
    %v1165 = vpop.f32.mrb[0].mxu0
    %v1166 = vadd.f32 0.0, %v1165
    %v1167 = vpop.f32.mrb[0].mxu0
    %v1168 = vpop.f32.mrb[0].mxu0
    %v1169 = vadd.f32 0.0, %v1168
    %v1170 = vpop.f32.mrb[0].mxu0
    %1171 = vmatprep.mubr.bf16.mxu0 %v171
    %1172 = vmatmul.mubr.bf16.gmra.mrb[0].mxu0 %v170
    %v1173 = vpop.f32.mrb[0].mxu0
    %v1174 = vadd.f32 0.0, %v1173
    %v1175 = vpop.f32.mrb[0].mxu0
    %v1176 = vpop.f32.mrb[0].mxu0
    %v1177 = vadd.f32 0.0, %v1176
    %v1178 = vpop.f32.mrb[0].mxu0
    %1179 = vmatprep.mubr.bf16.mxu0 %v174
    %1180 = vmatmul.mubr.bf16.gmra.mrb[0].mxu0 %v173
    %v1181 = vpop.f32.mrb[0].mxu0
    %v1182 = vadd.f32 0.0, %v1181
    %v1183 = vpop.f32.mrb[0].mxu0
    %v1184 = vpop.f32.mrb[0].mxu0
    %v1185 = vadd.f32 0.0, %v1184
    %v1186 = vpop.f32.mrb[0].mxu0
    %1187 = vmatprep.mubr.bf16.mxu0 %v177
    %1188 = vmatmul.mubr.bf16.gmra.mrb[0].mxu0 %v176
    %v1189 = vpop.f32.mrb[0].mxu0
    %v1190 = vadd.f32 0.0, %v1189
    %v1191 = vpop.f32.mrb[0].mxu0
    %v1192 = vpop.f32.mrb[0].mxu0
    %v1193 = vadd.f32 0.0, %v1192
    %v1194 = vpop.f32.mrb[0].mxu0
    %1195 = vmatprep.mubr.bf16.mxu0 %v180
    %1196 = vmatmul.mubr.bf16.gmra.mrb[0].mxu0 %v179
    %v1197 = vpop.f32.mrb[0].mxu0
    %v1198 = vadd.f32 0.0, %v1197
    %v1199 = vpop.f32.mrb[0].mxu0
    %v1200 = vpop.f32.mrb[0].mxu0
    %v1201 = vadd.f32 0.0, %v1200
    %v1202 = vpop.f32.mrb[0].mxu0
    %1203 = vmatprep.mubr.bf16.mxu0 %v183
    %1204 = vmatmul.mubr.bf16.gmra.mrb[0].mxu0 %v182
    %v1205 = vpop.f32.mrb[0].mxu0
    %v1206 = vadd.f32 0.0, %v1205
    %v1207 = vpop.f32.mrb[0].mxu0
    %v1208 = vpop.f32.mrb[0].mxu0
    %v1209 = vadd.f32 0.0, %v1208
    %v1210 = vpop.f32.mrb[0].mxu0
    %1211 = vdwg.mxu0
    %1212 = vmatprep.subr.bf16.mxu0 0
    %1213 = vmatpush1.bf16.msra.mxu0 %v571
    %1214 = vmatprep.subr.bf16.mxu0 0
    %1215 = vmatpush1.bf16.msra.mxu0 %v574
    %1216 = vmatprep.subr.bf16.mxu0 0
    %1217 = vmatpush1.bf16.msra.mxu0 %v577
    %1218 = vmatprep.subr.bf16.mxu0 0
    %1219 = vmatpush1.bf16.msra.mxu0 %v580
    %1220 = vmatprep.subr.bf16.mxu0 0
    %1221 = vmatpush1.bf16.msra.mxu0 %v583
    %1222 = vmatprep.subr.bf16.mxu0 0
    %1223 = vmatpush1.bf16.msra.mxu0 %v586
    %1224 = vmatprep.subr.bf16.mxu0 0
    %1225 = vmatpush1.bf16.msra.mxu0 %v589
    %1226 = vmatprep.subr.bf16.mxu0 0
    %1227 = vmatpush1.bf16.msra.mxu0 %v592
    %1228 = vmatprep.subr.bf16.mxu0 0
    %1229 = vmatpush1.bf16.msra.mxu0 0
    %1230 = vmatprep.subr.bf16.mxu0 0
    %1231 = vmatpush1.bf16.msra.mxu0 0
    %1232 = vmatprep.subr.bf16.mxu0 0
    %1233 = vmatpush1.bf16.msra.mxu0 0
    %1234 = vmatprep.subr.bf16.mxu0 0
    %1235 = vmatpush1.bf16.msra.mxu0 0
    %1236 = vmatprep.subr.bf16.mxu0 0
    %1237 = vmatpush1.bf16.msra.mxu0 0
    %1238 = vmatprep.subr.bf16.mxu0 0
    %1239 = vmatpush1.bf16.msra.mxu0 0
    %1240 = vmatprep.subr.bf16.mxu0 0
    %1241 = vmatpush1.bf16.msra.mxu0 0
    %1242 = vmatprep.subr.bf16.mxu0 0
    %1243 = vmatpush1.bf16.msra.mxu0 0
    %1244 = vmatprep.mubr.bf16.mxu0 0
    %1245 = vmatmul.mubr.bf16.gmra.mrb[0].mxu0 %v139
    %v1246 = vpop.f32.mrb[0].mxu0
    %v1247 = vadd.f32 %v1086, %v1246
    %v1248 = vpop.f32.mrb[0].mxu0
    %v1249 = vpop.f32.mrb[0].mxu0
    %v1250 = vadd.f32 %v1089, %v1249
    %v1251 = vpop.f32.mrb[0].mxu0
    %1252 = vmatprep.mubr.bf16.mxu0 0
    %1253 = vmatmul.mubr.bf16.gmra.mrb[0].mxu0 %v142
    %v1254 = vpop.f32.mrb[0].mxu0
    %v1255 = vadd.f32 %v1094, %v1254
    %v1256 = vpop.f32.mrb[0].mxu0
    %v1257 = vpop.f32.mrb[0].mxu0
    %v1258 = vadd.f32 %v1097, %v1257
    %v1259 = vpop.f32.mrb[0].mxu0
    %1260 = vmatprep.mubr.bf16.mxu0 0
    %1261 = vmatmul.mubr.bf16.gmra.mrb[0].mxu0 %v145
    %v1262 = vpop.f32.mrb[0].mxu0
    %v1263 = vadd.f32 %v1102, %v1262
    %v1264 = vpop.f32.mrb[0].mxu0
    %v1265 = vpop.f32.mrb[0].mxu0
    %v1266 = vadd.f32 %v1105, %v1265
    %v1267 = vpop.f32.mrb[0].mxu0
    %1268 = vmatprep.mubr.bf16.mxu0 0
    %1269 = vmatmul.mubr.bf16.gmra.mrb[0].mxu0 %v148
    %v1270 = vpop.f32.mrb[0].mxu0
    %v1271 = vadd.f32 %v1110, %v1270
    %v1272 = vpop.f32.mrb[0].mxu0
    %v1273 = vpop.f32.mrb[0].mxu0
    %v1274 = vadd.f32 %v1113, %v1273
    %v1275 = vpop.f32.mrb[0].mxu0
    %1276 = vmatprep.mubr.bf16.mxu0 0
    %1277 = vmatmul.mubr.bf16.gmra.mrb[0].mxu0 %v151
    %v1278 = vpop.f32.mrb[0].mxu0
    %v1279 = vadd.f32 %v1118, %v1278
    %v1280 = vpop.f32.mrb[0].mxu0
    %v1281 = vpop.f32.mrb[0].mxu0
    %v1282 = vadd.f32 %v1121, %v1281
    %v1283 = vpop.f32.mrb[0].mxu0
    %1284 = vmatprep.mubr.bf16.mxu0 0
    %1285 = vmatmul.mubr.bf16.gmra.mrb[0].mxu0 %v154
    %v1286 = vpop.f32.mrb[0].mxu0
    %v1287 = vadd.f32 %v1126, %v1286
    %v1288 = vpop.f32.mrb[0].mxu0
    %v1289 = vpop.f32.mrb[0].mxu0
    %v1290 = vadd.f32 %v1129, %v1289
    %v1291 = vpop.f32.mrb[0].mxu0
    %1292 = vmatprep.mubr.bf16.mxu0 0
    %1293 = vmatmul.mubr.bf16.gmra.mrb[0].mxu0 %v157
    %v1294 = vpop.f32.mrb[0].mxu0
    %v1295 = vadd.f32 %v1134, %v1294
    %v1296 = vpop.f32.mrb[0].mxu0
    %v1297 = vpop.f32.mrb[0].mxu0
    %v1298 = vadd.f32 %v1137, %v1297
    %v1299 = vpop.f32.mrb[0].mxu0
    %1300 = vmatprep.mubr.bf16.mxu0 0
    %1301 = vmatmul.mubr.bf16.gmra.mrb[0].mxu0 %v160
    %v1302 = vpop.f32.mrb[0].mxu0
    %v1303 = vadd.f32 %v1142, %v1302
    %v1304 = vpop.f32.mrb[0].mxu0
    %v1305 = vpop.f32.mrb[0].mxu0
    %v1306 = vadd.f32 %v1145, %v1305
    %v1307 = vpop.f32.mrb[0].mxu0
    %1308 = vmatprep.mubr.bf16.mxu0 0
    %1309 = vmatmul.mubr.bf16.gmra.mrb[0].mxu0 %v163
    %v1310 = vpop.f32.mrb[0].mxu0
    %v1311 = vadd.f32 %v1150, %v1310
    %v1312 = vpop.f32.mrb[0].mxu0
    %v1313 = vpop.f32.mrb[0].mxu0
    %v1314 = vadd.f32 %v1153, %v1313
    %v1315 = vpop.f32.mrb[0].mxu0
    %1316 = vmatprep.mubr.bf16.mxu0 0
    %1317 = vmatmul.mubr.bf16.gmra.mrb[0].mxu0 %v166
    %v1318 = vpop.f32.mrb[0].mxu0
    %v1319 = vadd.f32 %v1158, %v1318
    %v1320 = vpop.f32.mrb[0].mxu0
    %v1321 = vpop.f32.mrb[0].mxu0
    %v1322 = vadd.f32 %v1161, %v1321
    %v1323 = vpop.f32.mrb[0].mxu0
    %1324 = vmatprep.mubr.bf16.mxu0 0
    %1325 = vmatmul.mubr.bf16.gmra.mrb[0].mxu0 %v169
    %v1326 = vpop.f32.mrb[0].mxu0
    %v1327 = vadd.f32 %v1166, %v1326
    %v1328 = vpop.f32.mrb[0].mxu0
    %v1329 = vpop.f32.mrb[0].mxu0
    %v1330 = vadd.f32 %v1169, %v1329
    %v1331 = vpop.f32.mrb[0].mxu0
    %1332 = vmatprep.mubr.bf16.mxu0 0
    %1333 = vmatmul.mubr.bf16.gmra.mrb[0].mxu0 %v172
    %v1334 = vpop.f32.mrb[0].mxu0
    %v1335 = vadd.f32 %v1174, %v1334
    %v1336 = vpop.f32.mrb[0].mxu0
    %v1337 = vpop.f32.mrb[0].mxu0
    %v1338 = vadd.f32 %v1177, %v1337
    %v1339 = vpop.f32.mrb[0].mxu0
    %1340 = vmatprep.mubr.bf16.mxu0 0
    %1341 = vmatmul.mubr.bf16.gmra.mrb[0].mxu0 %v175
    %v1342 = vpop.f32.mrb[0].mxu0
    %v1343 = vadd.f32 %v1182, %v1342
    %v1344 = vpop.f32.mrb[0].mxu0
    %v1345 = vpop.f32.mrb[0].mxu0
    %v1346 = vadd.f32 %v1185, %v1345
    %v1347 = vpop.f32.mrb[0].mxu0
    %1348 = vmatprep.mubr.bf16.mxu0 0
    %1349 = vmatmul.mubr.bf16.gmra.mrb[0].mxu0 %v178
    %v1350 = vpop.f32.mrb[0].mxu0
    %v1351 = vadd.f32 %v1190, %v1350
    %v1352 = vpop.f32.mrb[0].mxu0
    %v1353 = vpop.f32.mrb[0].mxu0
    %v1354 = vadd.f32 %v1193, %v1353
    %v1355 = vpop.f32.mrb[0].mxu0
    %1356 = vmatprep.mubr.bf16.mxu0 0
    %1357 = vmatmul.mubr.bf16.gmra.mrb[0].mxu0 %v181
    %v1358 = vpop.f32.mrb[0].mxu0
    %v1359 = vadd.f32 %v1198, %v1358
    %v1360 = vpop.f32.mrb[0].mxu0
    %v1361 = vpop.f32.mrb[0].mxu0
    %v1362 = vadd.f32 %v1201, %v1361
    %v1363 = vpop.f32.mrb[0].mxu0
    %1364 = vmatprep.mubr.bf16.mxu0 0
    %1365 = vmatmul.mubr.bf16.gmra.mrb[0].mxu0 %v184
    %v1366 = vpop.f32.mrb[0].mxu0
    %v1367 = vadd.f32 %v1206, %v1366
    %v1368 = vpop.f32.mrb[0].mxu0
    %v1369 = vpop.f32.mrb[0].mxu0
    %v1370 = vadd.f32 %v1209, %v1369
    %v1371 = vpop.f32.mrb[0].mxu0
    %1372 = vdwg.mxu0
    %v1373 = vpack.c.bf16 %v897, %v893
    %v1374 = vpack.c.bf16 %v907, %v903
    %v1375 = vpack.c.bf16 %v917, %v913
    %v1376 = vpack.c.bf16 %v927, %v923
    %v1377 = vpack.c.bf16 %v937, %v933
    %v1378 = vpack.c.bf16 %v947, %v943
    %v1379 = vpack.c.bf16 %v957, %v953
    %v1380 = vpack.c.bf16 %v967, %v963
    %v1381 = vpack.c.bf16 %v977, %v973
    %v1382 = vpack.c.bf16 %v987, %v983
    %v1383 = vpack.c.bf16 %v997, %v993
    %v1384 = vpack.c.bf16 %v1007, %v1003
    %v1385 = vpack.c.bf16 %v1017, %v1013
    %v1386 = vpack.c.bf16 %v1027, %v1023
    %v1387 = vpack.c.bf16 %v1037, %v1033
    %v1388 = vpack.c.bf16 %v1047, %v1043
    %v1389 = vpack.c.bf16 %v899, %v895
    %v1390 = vpack.c.bf16 %v909, %v905
    %v1391 = vpack.c.bf16 %v919, %v915
    %v1392 = vpack.c.bf16 %v929, %v925
    %v1393 = vpack.c.bf16 %v939, %v935
    %v1394 = vpack.c.bf16 %v949, %v945
    %v1395 = vpack.c.bf16 %v959, %v955
    %v1396 = vpack.c.bf16 %v969, %v965
    %v1397 = vpack.c.bf16 %v979, %v975
    %v1398 = vpack.c.bf16 %v989, %v985
    %v1399 = vpack.c.bf16 %v999, %v995
    %v1400 = vpack.c.bf16 %v1009, %v1005
    %v1401 = vpack.c.bf16 %v1019, %v1015
    %v1402 = vpack.c.bf16 %v1029, %v1025
    %v1403 = vpack.c.bf16 %v1039, %v1035
    %v1404 = vpack.c.bf16 %v1049, %v1045
    %v1405 = vpack.c.bf16 %v1250, %v1247
    %v1406 = vpack.c.bf16 %v1258, %v1255
    %v1407 = vpack.c.bf16 %v1266, %v1263
    %v1408 = vpack.c.bf16 %v1274, %v1271
    %v1409 = vpack.c.bf16 %v1282, %v1279
    %v1410 = vpack.c.bf16 %v1290, %v1287
    %v1411 = vpack.c.bf16 %v1298, %v1295
    %v1412 = vpack.c.bf16 %v1306, %v1303
    %v1413 = vpack.c.bf16 %v1314, %v1311
    %v1414 = vpack.c.bf16 %v1322, %v1319
    %v1415 = vpack.c.bf16 %v1330, %v1327
    %v1416 = vpack.c.bf16 %v1338, %v1335
    %v1417 = vpack.c.bf16 %v1346, %v1343
    %v1418 = vpack.c.bf16 %v1354, %v1351
    %v1419 = vpack.c.bf16 %v1362, %v1359
    %v1420 = vpack.c.bf16 %v1370, %v1367
    %1421 = vmatprep.subr.bf16.mxu0 0
    %1422 = vmatpush1.bf16.xpose.msra.mxu0 %v1389
    %1423 = vmatprep.subr.bf16.mxu0 0
    %1424 = vmatpush1.bf16.xpose.msra.mxu0 %v1390
    %1425 = vmatprep.subr.bf16.mxu0 0
    %1426 = vmatpush1.bf16.xpose.msra.mxu0 %v1391
    %1427 = vmatprep.subr.bf16.mxu0 0
    %1428 = vmatpush1.bf16.xpose.msra.mxu0 %v1392
    %1429 = vmatprep.subr.bf16.mxu0 0
    %1430 = vmatpush1.bf16.xpose.msra.mxu0 %v1393
    %1431 = vmatprep.subr.bf16.mxu0 0
    %1432 = vmatpush1.bf16.xpose.msra.mxu0 %v1394
    %1433 = vmatprep.subr.bf16.mxu0 0
    %1434 = vmatpush1.bf16.xpose.msra.mxu0 %v1395
    %1435 = vmatprep.subr.bf16.mxu0 0
    %1436 = vmatpush1.bf16.xpose.msra.mxu0 %v1396
    %1437 = vmatprep.subr.bf16.mxu0 0
    %1438 = vmatpush1.bf16.xpose.msra.mxu0 0
    %1439 = vmatprep.subr.bf16.mxu0 0
    %1440 = vmatpush1.bf16.xpose.msra.mxu0 0
    %1441 = vmatprep.subr.bf16.mxu0 0
    %1442 = vmatpush1.bf16.xpose.msra.mxu0 0
    %1443 = vmatprep.subr.bf16.mxu0 0
    %1444 = vmatpush1.bf16.xpose.msra.mxu0 0
    %1445 = vmatprep.subr.bf16.mxu0 0
    %1446 = vmatpush1.bf16.xpose.msra.mxu0 0
    %1447 = vmatprep.subr.bf16.mxu0 0
    %1448 = vmatpush1.bf16.xpose.msra.mxu0 0
    %1449 = vmatprep.subr.bf16.mxu0 0
    %1450 = vmatpush1.bf16.xpose.msra.mxu0 0
    %1451 = vmatprep.subr.bf16.mxu0 0
    %1452 = vmatpush1.bf16.xpose.msra.mxu0 0
    %1453 = vmatprep.mubr.bf16.mxu0 0
    %1454 = vmatmul.mubr.bf16.gmra.mrb[0].mxu0 %v1373
    %v1455 = vpop.f32.mrb[0].mxu0
    %v1456 = vadd.f32 0.0, %v1455
    %v1457 = vpop.f32.mrb[0].mxu0
    %v1458 = vpop.f32.mrb[0].mxu0
    %v1459 = vadd.f32 0.0, %v1458
    %v1460 = vpop.f32.mrb[0].mxu0
    %1461 = vmatprep.mubr.bf16.mxu0 0
    %1462 = vmatmul.mubr.bf16.gmra.mrb[0].mxu0 %v1374
    %v1463 = vpop.f32.mrb[0].mxu0
    %v1464 = vadd.f32 0.0, %v1463
    %v1465 = vpop.f32.mrb[0].mxu0
    %v1466 = vpop.f32.mrb[0].mxu0
    %v1467 = vadd.f32 0.0, %v1466
    %v1468 = vpop.f32.mrb[0].mxu0
    %1469 = vmatprep.mubr.bf16.mxu0 0
    %1470 = vmatmul.mubr.bf16.gmra.mrb[0].mxu0 %v1375
    %v1471 = vpop.f32.mrb[0].mxu0
    %v1472 = vadd.f32 0.0, %v1471
    %v1473 = vpop.f32.mrb[0].mxu0
    %v1474 = vpop.f32.mrb[0].mxu0
    %v1475 = vadd.f32 0.0, %v1474
    %v1476 = vpop.f32.mrb[0].mxu0
    %1477 = vmatprep.mubr.bf16.mxu0 0
    %1478 = vmatmul.mubr.bf16.gmra.mrb[0].mxu0 %v1376
    %v1479 = vpop.f32.mrb[0].mxu0
    %v1480 = vadd.f32 0.0, %v1479
    %v1481 = vpop.f32.mrb[0].mxu0
    %v1482 = vpop.f32.mrb[0].mxu0
    %v1483 = vadd.f32 0.0, %v1482
    %v1484 = vpop.f32.mrb[0].mxu0
    %1485 = vmatprep.mubr.bf16.mxu0 0
    %1486 = vmatmul.mubr.bf16.gmra.mrb[0].mxu0 %v1377
    %v1487 = vpop.f32.mrb[0].mxu0
    %v1488 = vadd.f32 0.0, %v1487
    %v1489 = vpop.f32.mrb[0].mxu0
    %v1490 = vpop.f32.mrb[0].mxu0
    %v1491 = vadd.f32 0.0, %v1490
    %v1492 = vpop.f32.mrb[0].mxu0
    %1493 = vmatprep.mubr.bf16.mxu0 0
    %1494 = vmatmul.mubr.bf16.gmra.mrb[0].mxu0 %v1378
    %v1495 = vpop.f32.mrb[0].mxu0
    %v1496 = vadd.f32 0.0, %v1495
    %v1497 = vpop.f32.mrb[0].mxu0
    %v1498 = vpop.f32.mrb[0].mxu0
    %v1499 = vadd.f32 0.0, %v1498
    %v1500 = vpop.f32.mrb[0].mxu0
    %1501 = vmatprep.mubr.bf16.mxu0 0
    %1502 = vmatmul.mubr.bf16.gmra.mrb[0].mxu0 %v1379
    %v1503 = vpop.f32.mrb[0].mxu0
    %v1504 = vadd.f32 0.0, %v1503
    %v1505 = vpop.f32.mrb[0].mxu0
    %v1506 = vpop.f32.mrb[0].mxu0
    %v1507 = vadd.f32 0.0, %v1506
    %v1508 = vpop.f32.mrb[0].mxu0
    %1509 = vmatprep.mubr.bf16.mxu0 0
    %1510 = vmatmul.mubr.bf16.gmra.mrb[0].mxu0 %v1380
    %v1511 = vpop.f32.mrb[0].mxu0
    %v1512 = vadd.f32 0.0, %v1511
    %v1513 = vpop.f32.mrb[0].mxu0
    %v1514 = vpop.f32.mrb[0].mxu0
    %v1515 = vadd.f32 0.0, %v1514
    %v1516 = vpop.f32.mrb[0].mxu0
    %1517 = vdwg.mxu0
    %1518 = vmatprep.subr.bf16.mxu0 0
    %1519 = vmatpush1.bf16.xpose.msra.mxu0 %v1397
    %1520 = vmatprep.subr.bf16.mxu0 0
    %1521 = vmatpush1.bf16.xpose.msra.mxu0 %v1398
    %1522 = vmatprep.subr.bf16.mxu0 0
    %1523 = vmatpush1.bf16.xpose.msra.mxu0 %v1399
    %1524 = vmatprep.subr.bf16.mxu0 0
    %1525 = vmatpush1.bf16.xpose.msra.mxu0 %v1400
    %1526 = vmatprep.subr.bf16.mxu0 0
    %1527 = vmatpush1.bf16.xpose.msra.mxu0 %v1401
    %1528 = vmatprep.subr.bf16.mxu0 0
    %1529 = vmatpush1.bf16.xpose.msra.mxu0 %v1402
    %1530 = vmatprep.subr.bf16.mxu0 0
    %1531 = vmatpush1.bf16.xpose.msra.mxu0 %v1403
    %1532 = vmatprep.subr.bf16.mxu0 0
    %1533 = vmatpush1.bf16.xpose.msra.mxu0 %v1404
    %1534 = vmatprep.subr.bf16.mxu0 0
    %1535 = vmatpush1.bf16.xpose.msra.mxu0 0
    %1536 = vmatprep.subr.bf16.mxu0 0
    %1537 = vmatpush1.bf16.xpose.msra.mxu0 0
    %1538 = vmatprep.subr.bf16.mxu0 0
    %1539 = vmatpush1.bf16.xpose.msra.mxu0 0
    %1540 = vmatprep.subr.bf16.mxu0 0
    %1541 = vmatpush1.bf16.xpose.msra.mxu0 0
    %1542 = vmatprep.subr.bf16.mxu0 0
    %1543 = vmatpush1.bf16.xpose.msra.mxu0 0
    %1544 = vmatprep.subr.bf16.mxu0 0
    %1545 = vmatpush1.bf16.xpose.msra.mxu0 0
    %1546 = vmatprep.subr.bf16.mxu0 0
    %1547 = vmatpush1.bf16.xpose.msra.mxu0 0
    %1548 = vmatprep.subr.bf16.mxu0 0
    %1549 = vmatpush1.bf16.xpose.msra.mxu0 0
    %1550 = vmatprep.mubr.bf16.mxu0 0
    %1551 = vmatmul.mubr.bf16.gmra.mrb[0].mxu0 %v1381
    %v1552 = vpop.f32.mrb[0].mxu0
    %v1553 = vadd.f32 0.0, %v1552
    %v1554 = vpop.f32.mrb[0].mxu0
    %v1555 = vpop.f32.mrb[0].mxu0
    %v1556 = vadd.f32 0.0, %v1555
    %v1557 = vpop.f32.mrb[0].mxu0
    %1558 = vmatprep.mubr.bf16.mxu0 0
    %1559 = vmatmul.mubr.bf16.gmra.mrb[0].mxu0 %v1382
    %v1560 = vpop.f32.mrb[0].mxu0
    %v1561 = vadd.f32 0.0, %v1560
    %v1562 = vpop.f32.mrb[0].mxu0
    %v1563 = vpop.f32.mrb[0].mxu0
    %v1564 = vadd.f32 0.0, %v1563
    %v1565 = vpop.f32.mrb[0].mxu0
    %1566 = vmatprep.mubr.bf16.mxu0 0
    %1567 = vmatmul.mubr.bf16.gmra.mrb[0].mxu0 %v1383
    %v1568 = vpop.f32.mrb[0].mxu0
    %v1569 = vadd.f32 0.0, %v1568
    %v1570 = vpop.f32.mrb[0].mxu0
    %v1571 = vpop.f32.mrb[0].mxu0
    %v1572 = vadd.f32 0.0, %v1571
    %v1573 = vpop.f32.mrb[0].mxu0
    %1574 = vmatprep.mubr.bf16.mxu0 0
    %1575 = vmatmul.mubr.bf16.gmra.mrb[0].mxu0 %v1384
    %v1576 = vpop.f32.mrb[0].mxu0
    %v1577 = vadd.f32 0.0, %v1576
    %v1578 = vpop.f32.mrb[0].mxu0
    %v1579 = vpop.f32.mrb[0].mxu0
    %v1580 = vadd.f32 0.0, %v1579
    %v1581 = vpop.f32.mrb[0].mxu0
    %1582 = vmatprep.mubr.bf16.mxu0 0
    %1583 = vmatmul.mubr.bf16.gmra.mrb[0].mxu0 %v1385
    %v1584 = vpop.f32.mrb[0].mxu0
    %v1585 = vadd.f32 0.0, %v1584
    %v1586 = vpop.f32.mrb[0].mxu0
    %v1587 = vpop.f32.mrb[0].mxu0
    %v1588 = vadd.f32 0.0, %v1587
    %v1589 = vpop.f32.mrb[0].mxu0
    %1590 = vmatprep.mubr.bf16.mxu0 0
    %1591 = vmatmul.mubr.bf16.gmra.mrb[0].mxu0 %v1386
    %v1592 = vpop.f32.mrb[0].mxu0
    %v1593 = vadd.f32 0.0, %v1592
    %v1594 = vpop.f32.mrb[0].mxu0
    %v1595 = vpop.f32.mrb[0].mxu0
    %v1596 = vadd.f32 0.0, %v1595
    %v1597 = vpop.f32.mrb[0].mxu0
    %1598 = vmatprep.mubr.bf16.mxu0 0
    %1599 = vmatmul.mubr.bf16.gmra.mrb[0].mxu0 %v1387
    %v1600 = vpop.f32.mrb[0].mxu0
    %v1601 = vadd.f32 0.0, %v1600
    %v1602 = vpop.f32.mrb[0].mxu0
    %v1603 = vpop.f32.mrb[0].mxu0
    %v1604 = vadd.f32 0.0, %v1603
    %v1605 = vpop.f32.mrb[0].mxu0
    %1606 = vmatprep.mubr.bf16.mxu0 0
    %1607 = vmatmul.mubr.bf16.gmra.mrb[0].mxu0 %v1388
    %v1608 = vpop.f32.mrb[0].mxu0
    %v1609 = vadd.f32 0.0, %v1608
    %v1610 = vpop.f32.mrb[0].mxu0
    %v1611 = vpop.f32.mrb[0].mxu0
    %v1612 = vadd.f32 0.0, %v1611
    %v1613 = vpop.f32.mrb[0].mxu0
    %1614 = vdwg.mxu0
    %v1615 = vlaneseq
    %v1616 = vshrl.u32 %v1615, 7
    %v1617 = vadd.s32 %v1616, 8
    %v1618 = vadd.s32 %v1616, 16
    %v1619 = vadd.s32 %v1616, 24
    %v1620 = vadd.s32 %v1616, 32
    %v1621 = vadd.s32 %v1616, 40
    %v1622 = vadd.s32 %v1616, 48
    %v1623 = vadd.s32 %v1616, 56
    %v1624 = vadd.s32 %v1616, 64
    %v1625 = vadd.s32 %v1616, 72
    %v1626 = vadd.s32 %v1616, 80
    %v1627 = vadd.s32 %v1616, 88
    %v1628 = vadd.s32 %v1616, 96
    %v1629 = vadd.s32 %v1616, 104
    %v1630 = vadd.s32 %v1616, 112
    %v1631 = vadd.s32 %v1616, 120
    %v1632 = vlaneseq
    %v1633 = vand.u32 %v1632, 127
    %vm1634 = vcmp.le.s32.totalorder %v1633, %v1616
    %vm1635 = vcmp.le.s32.totalorder %v1633, %v1617
    %vm1636 = vcmp.le.s32.totalorder %v1633, %v1618
    %vm1637 = vcmp.le.s32.totalorder %v1633, %v1619
    %vm1638 = vcmp.le.s32.totalorder %v1633, %v1620
    %vm1639 = vcmp.le.s32.totalorder %v1633, %v1621
    %vm1640 = vcmp.le.s32.totalorder %v1633, %v1622
    %vm1641 = vcmp.le.s32.totalorder %v1633, %v1623
    %vm1642 = vcmp.le.s32.totalorder %v1633, %v1624
    %vm1643 = vcmp.le.s32.totalorder %v1633, %v1625
    %vm1644 = vcmp.le.s32.totalorder %v1633, %v1626
    %vm1645 = vcmp.le.s32.totalorder %v1633, %v1627
    %vm1646 = vcmp.le.s32.totalorder %v1633, %v1628
    %vm1647 = vcmp.le.s32.totalorder %v1633, %v1629
    %vm1648 = vcmp.le.s32.totalorder %v1633, %v1630
    %vm1649 = vcmp.le.s32.totalorder %v1633, %v1631
    %v1650 = vsel %vm1634, 1, 0
    %v1651 = vsel %vm1635, 1, 0
    %v1652 = vsel %vm1636, 1, 0
    %v1653 = vsel %vm1637, 1, 0
    %v1654 = vsel %vm1638, 1, 0
    %v1655 = vsel %vm1639, 1, 0
    %v1656 = vsel %vm1640, 1, 0
    %v1657 = vsel %vm1641, 1, 0
    %v1658 = vsel %vm1642, 1, 0
    %v1659 = vsel %vm1643, 1, 0
    %v1660 = vsel %vm1644, 1, 0
    %v1661 = vsel %vm1645, 1, 0
    %v1662 = vsel %vm1646, 1, 0
    %v1663 = vsel %vm1647, 1, 0
    %v1664 = vsel %vm1648, 1, 0
    %v1665 = vsel %vm1649, 1, 0
    %vm1666 = vcmp.eq.s32.totalorder %v1650, 1
    %vm1667 = vcmp.eq.s32.totalorder %v1651, 1
    %vm1668 = vcmp.eq.s32.totalorder %v1652, 1
    %vm1669 = vcmp.eq.s32.totalorder %v1653, 1
    %vm1670 = vcmp.eq.s32.totalorder %v1654, 1
    %vm1671 = vcmp.eq.s32.totalorder %v1655, 1
    %vm1672 = vcmp.eq.s32.totalorder %v1656, 1
    %vm1673 = vcmp.eq.s32.totalorder %v1657, 1
    %vm1674 = vcmp.eq.s32.totalorder %v1658, 1
    %vm1675 = vcmp.eq.s32.totalorder %v1659, 1
    %vm1676 = vcmp.eq.s32.totalorder %v1660, 1
    %vm1677 = vcmp.eq.s32.totalorder %v1661, 1
    %vm1678 = vcmp.eq.s32.totalorder %v1662, 1
    %vm1679 = vcmp.eq.s32.totalorder %v1663, 1
    %vm1680 = vcmp.eq.s32.totalorder %v1664, 1
    %vm1681 = vcmp.eq.s32.totalorder %v1665, 1
    %v1682 = vsel %vm1666, %v1456, -1e+30
    %v1683 = vsel %vm1667, %v1459, -1e+30
    %v1684 = vsel %vm1668, %v1464, -1e+30
    %v1685 = vsel %vm1669, %v1467, -1e+30
    %v1686 = vsel %vm1670, %v1472, -1e+30
    %v1687 = vsel %vm1671, %v1475, -1e+30
    %v1688 = vsel %vm1672, %v1480, -1e+30
    %v1689 = vsel %vm1673, %v1483, -1e+30
    %v1690 = vsel %vm1674, %v1488, -1e+30
    %v1691 = vsel %vm1675, %v1491, -1e+30
    %v1692 = vsel %vm1676, %v1496, -1e+30
    %v1693 = vsel %vm1677, %v1499, -1e+30
    %v1694 = vsel %vm1678, %v1504, -1e+30
    %v1695 = vsel %vm1679, %v1507, -1e+30
    %v1696 = vsel %vm1680, %v1512, -1e+30
    %v1697 = vsel %vm1681, %v1515, -1e+30
    %v1698 = vsel %vm1666, %v1553, -1e+30
    %v1699 = vsel %vm1667, %v1556, -1e+30
    %v1700 = vsel %vm1668, %v1561, -1e+30
    %v1701 = vsel %vm1669, %v1564, -1e+30
    %v1702 = vsel %vm1670, %v1569, -1e+30
    %v1703 = vsel %vm1671, %v1572, -1e+30
    %v1704 = vsel %vm1672, %v1577, -1e+30
    %v1705 = vsel %vm1673, %v1580, -1e+30
    %v1706 = vsel %vm1674, %v1585, -1e+30
    %v1707 = vsel %vm1675, %v1588, -1e+30
    %v1708 = vsel %vm1676, %v1593, -1e+30
    %v1709 = vsel %vm1677, %v1596, -1e+30
    %v1710 = vsel %vm1678, %v1601, -1e+30
    %v1711 = vsel %vm1679, %v1604, -1e+30
    %v1712 = vsel %vm1680, %v1609, -1e+30
    %v1713 = vsel %vm1681, %v1612, -1e+30
    %1714 = vmax.xlane.f32.xlu0 %v1682
    %v1715 = vpop.xlane.xlu0 %1714
    %1716 = vmax.xlane.f32.xlu0 %v1683
    %v1717 = vpop.xlane.xlu0 %1716
    %1718 = vmax.xlane.f32.xlu0 %v1684
    %v1719 = vpop.xlane.xlu0 %1718
    %1720 = vmax.xlane.f32.xlu0 %v1685
    %v1721 = vpop.xlane.xlu0 %1720
    %1722 = vmax.xlane.f32.xlu0 %v1686
    %v1723 = vpop.xlane.xlu0 %1722
    %1724 = vmax.xlane.f32.xlu0 %v1687
    %v1725 = vpop.xlane.xlu0 %1724
    %1726 = vmax.xlane.f32.xlu0 %v1688
    %v1727 = vpop.xlane.xlu0 %1726
    %1728 = vmax.xlane.f32.xlu0 %v1689
    %v1729 = vpop.xlane.xlu0 %1728
    %1730 = vmax.xlane.f32.xlu0 %v1690
    %v1731 = vpop.xlane.xlu0 %1730
    %1732 = vmax.xlane.f32.xlu0 %v1691
    %v1733 = vpop.xlane.xlu0 %1732
    %1734 = vmax.xlane.f32.xlu0 %v1692
    %v1735 = vpop.xlane.xlu0 %1734
    %1736 = vmax.xlane.f32.xlu0 %v1693
    %v1737 = vpop.xlane.xlu0 %1736
    %1738 = vmax.xlane.f32.xlu0 %v1694
    %v1739 = vpop.xlane.xlu0 %1738
    %1740 = vmax.xlane.f32.xlu0 %v1695
    %v1741 = vpop.xlane.xlu0 %1740
    %1742 = vmax.xlane.f32.xlu0 %v1696
    %v1743 = vpop.xlane.xlu0 %1742
    %1744 = vmax.xlane.f32.xlu0 %v1697
    %v1745 = vpop.xlane.xlu0 %1744
    %1746 = vmax.xlane.f32.xlu0 %v1698
    %v1747 = vpop.xlane.xlu0 %1746
    %1748 = vmax.xlane.f32.xlu0 %v1699
    %v1749 = vpop.xlane.xlu0 %1748
    %1750 = vmax.xlane.f32.xlu0 %v1700
    %v1751 = vpop.xlane.xlu0 %1750
    %1752 = vmax.xlane.f32.xlu0 %v1701
    %v1753 = vpop.xlane.xlu0 %1752
    %1754 = vmax.xlane.f32.xlu0 %v1702
    %v1755 = vpop.xlane.xlu0 %1754
    %1756 = vmax.xlane.f32.xlu0 %v1703
    %v1757 = vpop.xlane.xlu0 %1756
    %1758 = vmax.xlane.f32.xlu0 %v1704
    %v1759 = vpop.xlane.xlu0 %1758
    %1760 = vmax.xlane.f32.xlu0 %v1705
    %v1761 = vpop.xlane.xlu0 %1760
    %1762 = vmax.xlane.f32.xlu0 %v1706
    %v1763 = vpop.xlane.xlu0 %1762
    %1764 = vmax.xlane.f32.xlu0 %v1707
    %v1765 = vpop.xlane.xlu0 %1764
    %1766 = vmax.xlane.f32.xlu0 %v1708
    %v1767 = vpop.xlane.xlu0 %1766
    %1768 = vmax.xlane.f32.xlu0 %v1709
    %v1769 = vpop.xlane.xlu0 %1768
    %1770 = vmax.xlane.f32.xlu0 %v1710
    %v1771 = vpop.xlane.xlu0 %1770
    %1772 = vmax.xlane.f32.xlu0 %v1711
    %v1773 = vpop.xlane.xlu0 %1772
    %1774 = vmax.xlane.f32.xlu0 %v1712
    %v1775 = vpop.xlane.xlu0 %1774
    %1776 = vmax.xlane.f32.xlu0 %v1713
    %v1777 = vpop.xlane.xlu0 %1776
    %v1778 = vsub.f32 %v1682, %v1715
    %v1779 = vsub.f32 %v1683, %v1717
    %v1780 = vsub.f32 %v1684, %v1719
    %v1781 = vsub.f32 %v1685, %v1721
    %v1782 = vsub.f32 %v1686, %v1723
    %v1783 = vsub.f32 %v1687, %v1725
    %v1784 = vsub.f32 %v1688, %v1727
    %v1785 = vsub.f32 %v1689, %v1729
    %v1786 = vsub.f32 %v1690, %v1731
    %v1787 = vsub.f32 %v1691, %v1733
    %v1788 = vsub.f32 %v1692, %v1735
    %v1789 = vsub.f32 %v1693, %v1737
    %v1790 = vsub.f32 %v1694, %v1739
    %v1791 = vsub.f32 %v1695, %v1741
    %v1792 = vsub.f32 %v1696, %v1743
    %v1793 = vsub.f32 %v1697, %v1745
    %v1794 = vsub.f32 %v1698, %v1747
    %v1795 = vsub.f32 %v1699, %v1749
    %v1796 = vsub.f32 %v1700, %v1751
    %v1797 = vsub.f32 %v1701, %v1753
    %v1798 = vsub.f32 %v1702, %v1755
    %v1799 = vsub.f32 %v1703, %v1757
    %v1800 = vsub.f32 %v1704, %v1759
    %v1801 = vsub.f32 %v1705, %v1761
    %v1802 = vsub.f32 %v1706, %v1763
    %v1803 = vsub.f32 %v1707, %v1765
    %v1804 = vsub.f32 %v1708, %v1767
    %v1805 = vsub.f32 %v1709, %v1769
    %v1806 = vsub.f32 %v1710, %v1771
    %v1807 = vsub.f32 %v1711, %v1773
    %v1808 = vsub.f32 %v1712, %v1775
    %v1809 = vsub.f32 %v1713, %v1777
    %v1810 = vmul.f32 %v1778, 1.442695
    %v1811 = vpow.pop %v1810
    %v1812 = vmul.f32 %v1779, 1.442695
    %v1813 = vpow.pop %v1812
    %v1814 = vmul.f32 %v1780, 1.442695
    %v1815 = vpow.pop %v1814
    %v1816 = vmul.f32 %v1781, 1.442695
    %v1817 = vpow.pop %v1816
    %v1818 = vmul.f32 %v1782, 1.442695
    %v1819 = vpow.pop %v1818
    %v1820 = vmul.f32 %v1783, 1.442695
    %v1821 = vpow.pop %v1820
    %v1822 = vmul.f32 %v1784, 1.442695
    %v1823 = vpow.pop %v1822
    %v1824 = vmul.f32 %v1785, 1.442695
    %v1825 = vpow.pop %v1824
    %v1826 = vmul.f32 %v1786, 1.442695
    %v1827 = vpow.pop %v1826
    %v1828 = vmul.f32 %v1787, 1.442695
    %v1829 = vpow.pop %v1828
    %v1830 = vmul.f32 %v1788, 1.442695
    %v1831 = vpow.pop %v1830
    %v1832 = vmul.f32 %v1789, 1.442695
    %v1833 = vpow.pop %v1832
    %v1834 = vmul.f32 %v1790, 1.442695
    %v1835 = vpow.pop %v1834
    %v1836 = vmul.f32 %v1791, 1.442695
    %v1837 = vpow.pop %v1836
    %v1838 = vmul.f32 %v1792, 1.442695
    %v1839 = vpow.pop %v1838
    %v1840 = vmul.f32 %v1793, 1.442695
    %v1841 = vpow.pop %v1840
    %v1842 = vmul.f32 %v1794, 1.442695
    %v1843 = vpow.pop %v1842
    %v1844 = vmul.f32 %v1795, 1.442695
    %v1845 = vpow.pop %v1844
    %v1846 = vmul.f32 %v1796, 1.442695
    %v1847 = vpow.pop %v1846
    %v1848 = vmul.f32 %v1797, 1.442695
    %v1849 = vpow.pop %v1848
    %v1850 = vmul.f32 %v1798, 1.442695
    %v1851 = vpow.pop %v1850
    %v1852 = vmul.f32 %v1799, 1.442695
    %v1853 = vpow.pop %v1852
    %v1854 = vmul.f32 %v1800, 1.442695
    %v1855 = vpow.pop %v1854
    %v1856 = vmul.f32 %v1801, 1.442695
    %v1857 = vpow.pop %v1856
    %v1858 = vmul.f32 %v1802, 1.442695
    %v1859 = vpow.pop %v1858
    %v1860 = vmul.f32 %v1803, 1.442695
    %v1861 = vpow.pop %v1860
    %v1862 = vmul.f32 %v1804, 1.442695
    %v1863 = vpow.pop %v1862
    %v1864 = vmul.f32 %v1805, 1.442695
    %v1865 = vpow.pop %v1864
    %v1866 = vmul.f32 %v1806, 1.442695
    %v1867 = vpow.pop %v1866
    %v1868 = vmul.f32 %v1807, 1.442695
    %v1869 = vpow.pop %v1868
    %v1870 = vmul.f32 %v1808, 1.442695
    %v1871 = vpow.pop %v1870
    %v1872 = vmul.f32 %v1809, 1.442695
    %v1873 = vpow.pop %v1872
    %1874 = vadd.xlane.f32.xlu0 %v1811
    %v1875 = vpop.xlane.xlu0 %1874
    %1876 = vadd.xlane.f32.xlu0 %v1813
    %v1877 = vpop.xlane.xlu0 %1876
    %1878 = vadd.xlane.f32.xlu0 %v1815
    %v1879 = vpop.xlane.xlu0 %1878
    %1880 = vadd.xlane.f32.xlu0 %v1817
    %v1881 = vpop.xlane.xlu0 %1880
    %1882 = vadd.xlane.f32.xlu0 %v1819
    %v1883 = vpop.xlane.xlu0 %1882
    %1884 = vadd.xlane.f32.xlu0 %v1821
    %v1885 = vpop.xlane.xlu0 %1884
    %1886 = vadd.xlane.f32.xlu0 %v1823
    %v1887 = vpop.xlane.xlu0 %1886
    %1888 = vadd.xlane.f32.xlu0 %v1825
    %v1889 = vpop.xlane.xlu0 %1888
    %1890 = vadd.xlane.f32.xlu0 %v1827
    %v1891 = vpop.xlane.xlu0 %1890
    %1892 = vadd.xlane.f32.xlu0 %v1829
    %v1893 = vpop.xlane.xlu0 %1892
    %1894 = vadd.xlane.f32.xlu0 %v1831
    %v1895 = vpop.xlane.xlu0 %1894
    %1896 = vadd.xlane.f32.xlu0 %v1833
    %v1897 = vpop.xlane.xlu0 %1896
    %1898 = vadd.xlane.f32.xlu0 %v1835
    %v1899 = vpop.xlane.xlu0 %1898
    %1900 = vadd.xlane.f32.xlu0 %v1837
    %v1901 = vpop.xlane.xlu0 %1900
    %1902 = vadd.xlane.f32.xlu0 %v1839
    %v1903 = vpop.xlane.xlu0 %1902
    %1904 = vadd.xlane.f32.xlu0 %v1841
    %v1905 = vpop.xlane.xlu0 %1904
    %1906 = vadd.xlane.f32.xlu0 %v1843
    %v1907 = vpop.xlane.xlu0 %1906
    %1908 = vadd.xlane.f32.xlu0 %v1845
    %v1909 = vpop.xlane.xlu0 %1908
    %1910 = vadd.xlane.f32.xlu0 %v1847
    %v1911 = vpop.xlane.xlu0 %1910
    %1912 = vadd.xlane.f32.xlu0 %v1849
    %v1913 = vpop.xlane.xlu0 %1912
    %1914 = vadd.xlane.f32.xlu0 %v1851
    %v1915 = vpop.xlane.xlu0 %1914
    %1916 = vadd.xlane.f32.xlu0 %v1853
    %v1917 = vpop.xlane.xlu0 %1916
    %1918 = vadd.xlane.f32.xlu0 %v1855
    %v1919 = vpop.xlane.xlu0 %1918
    %1920 = vadd.xlane.f32.xlu0 %v1857
    %v1921 = vpop.xlane.xlu0 %1920
    %1922 = vadd.xlane.f32.xlu0 %v1859
    %v1923 = vpop.xlane.xlu0 %1922
    %1924 = vadd.xlane.f32.xlu0 %v1861
    %v1925 = vpop.xlane.xlu0 %1924
    %1926 = vadd.xlane.f32.xlu0 %v1863
    %v1927 = vpop.xlane.xlu0 %1926
    %1928 = vadd.xlane.f32.xlu0 %v1865
    %v1929 = vpop.xlane.xlu0 %1928
    %1930 = vadd.xlane.f32.xlu0 %v1867
    %v1931 = vpop.xlane.xlu0 %1930
    %1932 = vadd.xlane.f32.xlu0 %v1869
    %v1933 = vpop.xlane.xlu0 %1932
    %1934 = vadd.xlane.f32.xlu0 %v1871
    %v1935 = vpop.xlane.xlu0 %1934
    %1936 = vadd.xlane.f32.xlu0 %v1873
    %v1937 = vpop.xlane.xlu0 %1936
    %v1938 = vpack.c.bf16 %v1813, %v1811
    %v1939 = vpack.c.bf16 %v1817, %v1815
    %v1940 = vpack.c.bf16 %v1821, %v1819
    %v1941 = vpack.c.bf16 %v1825, %v1823
    %v1942 = vpack.c.bf16 %v1829, %v1827
    %v1943 = vpack.c.bf16 %v1833, %v1831
    %v1944 = vpack.c.bf16 %v1837, %v1835
    %v1945 = vpack.c.bf16 %v1841, %v1839
    %v1946 = vpack.c.bf16 %v1845, %v1843
    %v1947 = vpack.c.bf16 %v1849, %v1847
    %v1948 = vpack.c.bf16 %v1853, %v1851
    %v1949 = vpack.c.bf16 %v1857, %v1855
    %v1950 = vpack.c.bf16 %v1861, %v1859
    %v1951 = vpack.c.bf16 %v1865, %v1863
    %v1952 = vpack.c.bf16 %v1869, %v1867
    %v1953 = vpack.c.bf16 %v1873, %v1871
    %1954 = vmatprep.subr.bf16.mxu0 0
    %1955 = vmatpush1.bf16.msra.mxu0 %v1405
    %1956 = vmatprep.subr.bf16.mxu0 0
    %1957 = vmatpush1.bf16.msra.mxu0 %v1406
    %1958 = vmatprep.subr.bf16.mxu0 0
    %1959 = vmatpush1.bf16.msra.mxu0 %v1407
    %1960 = vmatprep.subr.bf16.mxu0 0
    %1961 = vmatpush1.bf16.msra.mxu0 %v1408
    %1962 = vmatprep.subr.bf16.mxu0 0
    %1963 = vmatpush1.bf16.msra.mxu0 %v1409
    %1964 = vmatprep.subr.bf16.mxu0 0
    %1965 = vmatpush1.bf16.msra.mxu0 %v1410
    %1966 = vmatprep.subr.bf16.mxu0 0
    %1967 = vmatpush1.bf16.msra.mxu0 %v1411
    %1968 = vmatprep.subr.bf16.mxu0 0
    %1969 = vmatpush1.bf16.msra.mxu0 %v1412
    %1970 = vmatprep.subr.bf16.mxu0 0
    %1971 = vmatpush1.bf16.msra.mxu0 0
    %1972 = vmatprep.subr.bf16.mxu0 0
    %1973 = vmatpush1.bf16.msra.mxu0 0
    %1974 = vmatprep.subr.bf16.mxu0 0
    %1975 = vmatpush1.bf16.msra.mxu0 0
    %1976 = vmatprep.subr.bf16.mxu0 0
    %1977 = vmatpush1.bf16.msra.mxu0 0
    %1978 = vmatprep.subr.bf16.mxu0 0
    %1979 = vmatpush1.bf16.msra.mxu0 0
    %1980 = vmatprep.subr.bf16.mxu0 0
    %1981 = vmatpush1.bf16.msra.mxu0 0
    %1982 = vmatprep.subr.bf16.mxu0 0
    %1983 = vmatpush1.bf16.msra.mxu0 0
    %1984 = vmatprep.subr.bf16.mxu0 0
    %1985 = vmatpush1.bf16.msra.mxu0 0
    %1986 = vmatprep.mubr.bf16.mxu0 0
    %1987 = vmatmul.mubr.bf16.gmra.mrb[0].mxu0 %v1938
    %v1988 = vpop.f32.mrb[0].mxu0
    %v1989 = vadd.f32 0.0, %v1988
    %v1990 = vpop.f32.mrb[0].mxu0
    %v1991 = vpop.f32.mrb[0].mxu0
    %v1992 = vadd.f32 0.0, %v1991
    %v1993 = vpop.f32.mrb[0].mxu0
    %1994 = vmatprep.mubr.bf16.mxu0 0
    %1995 = vmatmul.mubr.bf16.gmra.mrb[0].mxu0 %v1939
    %v1996 = vpop.f32.mrb[0].mxu0
    %v1997 = vadd.f32 0.0, %v1996
    %v1998 = vpop.f32.mrb[0].mxu0
    %v1999 = vpop.f32.mrb[0].mxu0
    %v2000 = vadd.f32 0.0, %v1999
    %v2001 = vpop.f32.mrb[0].mxu0
    %2002 = vmatprep.mubr.bf16.mxu0 0
    %2003 = vmatmul.mubr.bf16.gmra.mrb[0].mxu0 %v1940
    %v2004 = vpop.f32.mrb[0].mxu0
    %v2005 = vadd.f32 0.0, %v2004
    %v2006 = vpop.f32.mrb[0].mxu0
    %v2007 = vpop.f32.mrb[0].mxu0
    %v2008 = vadd.f32 0.0, %v2007
    %v2009 = vpop.f32.mrb[0].mxu0
    %2010 = vmatprep.mubr.bf16.mxu0 0
    %2011 = vmatmul.mubr.bf16.gmra.mrb[0].mxu0 %v1941
    %v2012 = vpop.f32.mrb[0].mxu0
    %v2013 = vadd.f32 0.0, %v2012
    %v2014 = vpop.f32.mrb[0].mxu0
    %v2015 = vpop.f32.mrb[0].mxu0
    %v2016 = vadd.f32 0.0, %v2015
    %v2017 = vpop.f32.mrb[0].mxu0
    %2018 = vmatprep.mubr.bf16.mxu0 0
    %2019 = vmatmul.mubr.bf16.gmra.mrb[0].mxu0 %v1942
    %v2020 = vpop.f32.mrb[0].mxu0
    %v2021 = vadd.f32 0.0, %v2020
    %v2022 = vpop.f32.mrb[0].mxu0
    %v2023 = vpop.f32.mrb[0].mxu0
    %v2024 = vadd.f32 0.0, %v2023
    %v2025 = vpop.f32.mrb[0].mxu0
    %2026 = vmatprep.mubr.bf16.mxu0 0
    %2027 = vmatmul.mubr.bf16.gmra.mrb[0].mxu0 %v1943
    %v2028 = vpop.f32.mrb[0].mxu0
    %v2029 = vadd.f32 0.0, %v2028
    %v2030 = vpop.f32.mrb[0].mxu0
    %v2031 = vpop.f32.mrb[0].mxu0
    %v2032 = vadd.f32 0.0, %v2031
    %v2033 = vpop.f32.mrb[0].mxu0
    %2034 = vmatprep.mubr.bf16.mxu0 0
    %2035 = vmatmul.mubr.bf16.gmra.mrb[0].mxu0 %v1944
    %v2036 = vpop.f32.mrb[0].mxu0
    %v2037 = vadd.f32 0.0, %v2036
    %v2038 = vpop.f32.mrb[0].mxu0
    %v2039 = vpop.f32.mrb[0].mxu0
    %v2040 = vadd.f32 0.0, %v2039
    %v2041 = vpop.f32.mrb[0].mxu0
    %2042 = vmatprep.mubr.bf16.mxu0 0
    %2043 = vmatmul.mubr.bf16.gmra.mrb[0].mxu0 %v1945
    %v2044 = vpop.f32.mrb[0].mxu0
    %v2045 = vadd.f32 0.0, %v2044
    %v2046 = vpop.f32.mrb[0].mxu0
    %v2047 = vpop.f32.mrb[0].mxu0
    %v2048 = vadd.f32 0.0, %v2047
    %v2049 = vpop.f32.mrb[0].mxu0
    %2050 = vdwg.mxu0
    %2051 = vmatprep.subr.bf16.mxu0 0
    %2052 = vmatpush1.bf16.msra.mxu0 %v1413
    %2053 = vmatprep.subr.bf16.mxu0 0
    %2054 = vmatpush1.bf16.msra.mxu0 %v1414
    %2055 = vmatprep.subr.bf16.mxu0 0
    %2056 = vmatpush1.bf16.msra.mxu0 %v1415
    %2057 = vmatprep.subr.bf16.mxu0 0
    %2058 = vmatpush1.bf16.msra.mxu0 %v1416
    %2059 = vmatprep.subr.bf16.mxu0 0
    %2060 = vmatpush1.bf16.msra.mxu0 %v1417
    %2061 = vmatprep.subr.bf16.mxu0 0
    %2062 = vmatpush1.bf16.msra.mxu0 %v1418
    %2063 = vmatprep.subr.bf16.mxu0 0
    %2064 = vmatpush1.bf16.msra.mxu0 %v1419
    %2065 = vmatprep.subr.bf16.mxu0 0
    %2066 = vmatpush1.bf16.msra.mxu0 %v1420
    %2067 = vmatprep.subr.bf16.mxu0 0
    %2068 = vmatpush1.bf16.msra.mxu0 0
    %2069 = vmatprep.subr.bf16.mxu0 0
    %2070 = vmatpush1.bf16.msra.mxu0 0
    %2071 = vmatprep.subr.bf16.mxu0 0
    %2072 = vmatpush1.bf16.msra.mxu0 0
    %2073 = vmatprep.subr.bf16.mxu0 0
    %2074 = vmatpush1.bf16.msra.mxu0 0
    %2075 = vmatprep.subr.bf16.mxu0 0
    %2076 = vmatpush1.bf16.msra.mxu0 0
    %2077 = vmatprep.subr.bf16.mxu0 0
    %2078 = vmatpush1.bf16.msra.mxu0 0
    %2079 = vmatprep.subr.bf16.mxu0 0
    %2080 = vmatpush1.bf16.msra.mxu0 0
    %2081 = vmatprep.subr.bf16.mxu0 0
    %2082 = vmatpush1.bf16.msra.mxu0 0
    %2083 = vmatprep.mubr.bf16.mxu0 0
    %2084 = vmatmul.mubr.bf16.gmra.mrb[0].mxu0 %v1946
    %v2085 = vpop.f32.mrb[0].mxu0
    %v2086 = vadd.f32 0.0, %v2085
    %v2087 = vpop.f32.mrb[0].mxu0
    %v2088 = vpop.f32.mrb[0].mxu0
    %v2089 = vadd.f32 0.0, %v2088
    %v2090 = vpop.f32.mrb[0].mxu0
    %2091 = vmatprep.mubr.bf16.mxu0 0
    %2092 = vmatmul.mubr.bf16.gmra.mrb[0].mxu0 %v1947
    %v2093 = vpop.f32.mrb[0].mxu0
    %v2094 = vadd.f32 0.0, %v2093
    %v2095 = vpop.f32.mrb[0].mxu0
    %v2096 = vpop.f32.mrb[0].mxu0
    %v2097 = vadd.f32 0.0, %v2096
    %v2098 = vpop.f32.mrb[0].mxu0
    %2099 = vmatprep.mubr.bf16.mxu0 0
    %2100 = vmatmul.mubr.bf16.gmra.mrb[0].mxu0 %v1948
    %v2101 = vpop.f32.mrb[0].mxu0
    %v2102 = vadd.f32 0.0, %v2101
    %v2103 = vpop.f32.mrb[0].mxu0
    %v2104 = vpop.f32.mrb[0].mxu0
    %v2105 = vadd.f32 0.0, %v2104
    %v2106 = vpop.f32.mrb[0].mxu0
    %2107 = vmatprep.mubr.bf16.mxu0 0
    %2108 = vmatmul.mubr.bf16.gmra.mrb[0].mxu0 %v1949
    %v2109 = vpop.f32.mrb[0].mxu0
    %v2110 = vadd.f32 0.0, %v2109
    %v2111 = vpop.f32.mrb[0].mxu0
    %v2112 = vpop.f32.mrb[0].mxu0
    %v2113 = vadd.f32 0.0, %v2112
    %v2114 = vpop.f32.mrb[0].mxu0
    %2115 = vmatprep.mubr.bf16.mxu0 0
    %2116 = vmatmul.mubr.bf16.gmra.mrb[0].mxu0 %v1950
    %v2117 = vpop.f32.mrb[0].mxu0
    %v2118 = vadd.f32 0.0, %v2117
    %v2119 = vpop.f32.mrb[0].mxu0
    %v2120 = vpop.f32.mrb[0].mxu0
    %v2121 = vadd.f32 0.0, %v2120
    %v2122 = vpop.f32.mrb[0].mxu0
    %2123 = vmatprep.mubr.bf16.mxu0 0
    %2124 = vmatmul.mubr.bf16.gmra.mrb[0].mxu0 %v1951
    %v2125 = vpop.f32.mrb[0].mxu0
    %v2126 = vadd.f32 0.0, %v2125
    %v2127 = vpop.f32.mrb[0].mxu0
    %v2128 = vpop.f32.mrb[0].mxu0
    %v2129 = vadd.f32 0.0, %v2128
    %v2130 = vpop.f32.mrb[0].mxu0
    %2131 = vmatprep.mubr.bf16.mxu0 0
    %2132 = vmatmul.mubr.bf16.gmra.mrb[0].mxu0 %v1952
    %v2133 = vpop.f32.mrb[0].mxu0
    %v2134 = vadd.f32 0.0, %v2133
    %v2135 = vpop.f32.mrb[0].mxu0
    %v2136 = vpop.f32.mrb[0].mxu0
    %v2137 = vadd.f32 0.0, %v2136
    %v2138 = vpop.f32.mrb[0].mxu0
    %2139 = vmatprep.mubr.bf16.mxu0 0
    %2140 = vmatmul.mubr.bf16.gmra.mrb[0].mxu0 %v1953
    %v2141 = vpop.f32.mrb[0].mxu0
    %v2142 = vadd.f32 0.0, %v2141
    %v2143 = vpop.f32.mrb[0].mxu0
    %v2144 = vpop.f32.mrb[0].mxu0
    %v2145 = vadd.f32 0.0, %v2144
    %v2146 = vpop.f32.mrb[0].mxu0
    %2147 = vdwg.mxu0
    %v2148 = vrcp.pop %v1875
    %v2149 = vrcp.pop %v1877
    %v2150 = vrcp.pop %v1879
    %v2151 = vrcp.pop %v1881
    %v2152 = vrcp.pop %v1883
    %v2153 = vrcp.pop %v1885
    %v2154 = vrcp.pop %v1887
    %v2155 = vrcp.pop %v1889
    %v2156 = vrcp.pop %v1891
    %v2157 = vrcp.pop %v1893
    %v2158 = vrcp.pop %v1895
    %v2159 = vrcp.pop %v1897
    %v2160 = vrcp.pop %v1899
    %v2161 = vrcp.pop %v1901
    %v2162 = vrcp.pop %v1903
    %v2163 = vrcp.pop %v1905
    %v2164 = vrcp.pop %v1907
    %v2165 = vrcp.pop %v1909
    %v2166 = vrcp.pop %v1911
    %v2167 = vrcp.pop %v1913
    %v2168 = vrcp.pop %v1915
    %v2169 = vrcp.pop %v1917
    %v2170 = vrcp.pop %v1919
    %v2171 = vrcp.pop %v1921
    %v2172 = vrcp.pop %v1923
    %v2173 = vrcp.pop %v1925
    %v2174 = vrcp.pop %v1927
    %v2175 = vrcp.pop %v1929
    %v2176 = vrcp.pop %v1931
    %v2177 = vrcp.pop %v1933
    %v2178 = vrcp.pop %v1935
    %v2179 = vrcp.pop %v1937
    %v2180 = vmul.f32 %v1989, %v2148
    %v2181 = vmul.f32 %v1992, %v2149
    %v2182 = vmul.f32 %v1997, %v2150
    %v2183 = vmul.f32 %v2000, %v2151
    %v2184 = vmul.f32 %v2005, %v2152
    %v2185 = vmul.f32 %v2008, %v2153
    %v2186 = vmul.f32 %v2013, %v2154
    %v2187 = vmul.f32 %v2016, %v2155
    %v2188 = vmul.f32 %v2021, %v2156
    %v2189 = vmul.f32 %v2024, %v2157
    %v2190 = vmul.f32 %v2029, %v2158
    %v2191 = vmul.f32 %v2032, %v2159
    %v2192 = vmul.f32 %v2037, %v2160
    %v2193 = vmul.f32 %v2040, %v2161
    %v2194 = vmul.f32 %v2045, %v2162
    %v2195 = vmul.f32 %v2048, %v2163
    %v2196 = vmul.f32 %v2086, %v2164
    %v2197 = vmul.f32 %v2089, %v2165
    %v2198 = vmul.f32 %v2094, %v2166
    %v2199 = vmul.f32 %v2097, %v2167
    %v2200 = vmul.f32 %v2102, %v2168
    %v2201 = vmul.f32 %v2105, %v2169
    %v2202 = vmul.f32 %v2110, %v2170
    %v2203 = vmul.f32 %v2113, %v2171
    %v2204 = vmul.f32 %v2118, %v2172
    %v2205 = vmul.f32 %v2121, %v2173
    %v2206 = vmul.f32 %v2126, %v2174
    %v2207 = vmul.f32 %v2129, %v2175
    %v2208 = vmul.f32 %v2134, %v2176
    %v2209 = vmul.f32 %v2137, %v2177
    %v2210 = vmul.f32 %v2142, %v2178
    %v2211 = vmul.f32 %v2145, %v2179
    %2212 = vst [vmem:[#allocation7] sm:$0xff] %v2180
    %2213 = vst [vmem:[#allocation7 + $0x8] sm:$0xff] %v2181
    %2214 = vst [vmem:[#allocation7 + $0x10] sm:$0xff] %v2182
    %2215 = vst [vmem:[#allocation7 + $0x18] sm:$0xff] %v2183
    %2216 = vst [vmem:[#allocation7 + $0x20] sm:$0xff] %v2184
    %2217 = vst [vmem:[#allocation7 + $0x28] sm:$0xff] %v2185
    %2218 = vst [vmem:[#allocation7 + $0x30] sm:$0xff] %v2186
    %2219 = vst [vmem:[#allocation7 + $0x38] sm:$0xff] %v2187
    %2220 = vst [vmem:[#allocation7 + $0x40] sm:$0xff] %v2188
    %2221 = vst [vmem:[#allocation7 + $0x48] sm:$0xff] %v2189
    %2222 = vst [vmem:[#allocation7 + $0x50] sm:$0xff] %v2190
    %2223 = vst [vmem:[#allocation7 + $0x58] sm:$0xff] %v2191
    %2224 = vst [vmem:[#allocation7 + $0x60] sm:$0xff] %v2192
    %2225 = vst [vmem:[#allocation7 + $0x68] sm:$0xff] %v2193
    %2226 = vst [vmem:[#allocation7 + $0x70] sm:$0xff] %v2194
    %2227 = vst [vmem:[#allocation7 + $0x78] sm:$0xff] %v2195
    %2228 = vst [vmem:[#allocation7 + $0x80] sm:$0xff] %v2196
    %2229 = vst [vmem:[#allocation7 + $0x88] sm:$0xff] %v2197
    %2230 = vst [vmem:[#allocation7 + $0x90] sm:$0xff] %v2198
    %2231 = vst [vmem:[#allocation7 + $0x98] sm:$0xff] %v2199
    %2232 = vst [vmem:[#allocation7 + $0xa0] sm:$0xff] %v2200
    %2233 = vst [vmem:[#allocation7 + $0xa8] sm:$0xff] %v2201
    %2234 = vst [vmem:[#allocation7 + $0xb0] sm:$0xff] %v2202
    %2235 = vst [vmem:[#allocation7 + $0xb8] sm:$0xff] %v2203
    %2236 = vst [vmem:[#allocation7 + $0xc0] sm:$0xff] %v2204
    %2237 = vst [vmem:[#allocation7 + $0xc8] sm:$0xff] %v2205
    %2238 = vst [vmem:[#allocation7 + $0xd0] sm:$0xff] %v2206
    %2239 = vst [vmem:[#allocation7 + $0xd8] sm:$0xff] %v2207
    %2240 = vst [vmem:[#allocation7 + $0xe0] sm:$0xff] %v2208
    %2241 = vst [vmem:[#allocation7 + $0xe8] sm:$0xff] %v2209
    %2242 = vst [vmem:[#allocation7 + $0xf0] sm:$0xff] %v2210
    %2243 = vst [vmem:[#allocation7 + $0xf8] sm:$0xff] %v2211
    // Predicated region
    $region18: #{head_forward.1} parent=1 // pred_check
      _
    $region19: #{head_forward.1} parent=1 // pred_check_branch
      %2245 = sbr.rel (0) target = $region21
    $region20: #{head_forward.1} parent=1 // pred_region
      %s2247 = ssub.s32 4096, 4096
      %2248 = vsyncadd [#allocation4], %s2247
      %s2249 = sshll.u32 [#allocation7], 4
      %s2250 = int_to_ptr.vmem [resolvable:$true] %s2249
      %2255 = dma.vmem_to_hbm [thread:$0]  %s2250, 4096, %s2, [#allocation4], 128, 128, 8
    $region21: #{head_forward.1} parent=1 // pred_fallthru
      _
    // Predicated region
    $region22: #{head_forward.1} parent=1 // pred_check
      _
    $region23: #{head_forward.1} parent=1 // pred_check_branch
      %2257 = sbr.rel (0) target = $region25
    $region24: #{head_forward.1} parent=1 // pred_region
      %2258 = dma.done [#allocation4], 4096
    $region25: #{head_forward.1} parent=1 // pred_fallthru
      _
    %2259 = vsyncpa [#allocation3], 1
    %2260 = vsyncpa [#allocation6], 1
    %2261 = vsyncpa [#allocation4], 1

</llo_original>
